<compile_context>
chip_gen: v6e
topology: v6e:2x2x1
jax: 0.10.0
libtpu: 0.0.40
codegen_flags: <defaults>
</compile_context>

<pallas_src>
import functools

import jax
import jax.numpy as jnp
from jax.experimental import pallas as pl
from jax.experimental.pallas import tpu as pltpu

INPUT_SIZE = 28 * 28          # 784 (PyTorch input feature count)
PADDED_INPUT = 896            # 7 * 128, lane-dense K for layer 1
H1, H2, H3 = 512, 256, 128
NUM_CLASSES = 10              # linear4 exists in the module but is unused in forward


def _round_up(n, m):
    return ((n + m - 1) // m) * m


def _mlp_kernel(x_ref, w1_ref, b1_ref, w2_ref, b2_ref, w3_ref, b3_ref, o_ref):
    # Fully fused 3-layer MLP. bf16 operands on the MXU, f32 accumulation,
    # f32 bias add + ReLU, recast to bf16 before feeding the next matmul.
    x = x_ref[...]                                                   # bf16 (tile, 896)
    h1 = jnp.dot(x, w1_ref[...], preferred_element_type=jnp.float32) + b1_ref[...]
    h1 = jnp.maximum(h1, 0.0).astype(jnp.bfloat16)
    h2 = jnp.dot(h1, w2_ref[...], preferred_element_type=jnp.float32) + b2_ref[...]
    h2 = jnp.maximum(h2, 0.0).astype(jnp.bfloat16)
    h3 = jnp.dot(h2, w3_ref[...], preferred_element_type=jnp.float32) + b3_ref[...]
    h3 = jnp.maximum(h3, 0.0)
    # Dropout(p=0.0) is the identity (keep-prob 1.0) -> no-op.
    o_ref[...] = h3.astype(o_ref.dtype)


@functools.partial(jax.jit, static_argnames=("batch_tile",))
def simple_fc_forward(x, params, *, batch_tile=512):
    """x: (B, 784) float32. Returns (B, 128) float32."""
    w1, b1, w2, b2, w3, b3 = params
    B = x.shape[0]

    # Zero-pad the feature dim 784 -> 896 (W1 is stored with matching zero rows).
    if x.shape[1] != PADDED_INPUT:
        x = jnp.pad(x, ((0, 0), (0, PADDED_INPUT - x.shape[1])))

    # Large MXU-filling batch tile; shrink for tiny batches so the test stays cheap.
    eff_tile = min(batch_tile, _round_up(B, 16))
    padded_b = _round_up(B, eff_tile)
    if padded_b != B:
        x = jnp.pad(x, ((0, padded_b - B), (0, 0)))
    x = x.astype(jnp.bfloat16)

    grid = (padded_b // eff_tile,)

    # Constant index_map -> block stays resident in VMEM across grid steps
    # (no re-DMA of weights/biases on every batch tile).
    full = lambda shape: pl.BlockSpec(shape, lambda i: (0, 0))

    out = pl.pallas_call(
        _mlp_kernel,
        out_shape=jax.ShapeDtypeStruct((padded_b, H3), jnp.float32),
        grid_spec=pltpu.PrefetchScalarGridSpec(
            num_scalar_prefetch=0,
            grid=grid,
            in_specs=[
                pl.BlockSpec((eff_tile, PADDED_INPUT), lambda i: (i, 0)),  # x tile
                full((PADDED_INPUT, H1)), full((1, H1)),                   # W1, b1
                full((H1, H2)),           full((1, H2)),                   # W2, b2
                full((H2, H3)),           full((1, H3)),                   # W3, b3
            ],
            out_specs=pl.BlockSpec((eff_tile, H3), lambda i: (i, 0)),
        ),
        compiler_params=pltpu.CompilerParams(
            dimension_semantics=("parallel",),   # batch tiles independent -> megacore
        ),
    )(x, w1, b1, w2, b2, w3, b3)

    return out[:B]


def init_params(key):
    """Deterministic init matching nn.Linear's U(-1/sqrt(fan_in), 1/sqrt(fan_in)).

    Weights are stored (in_features, out_features) for the x @ W convention,
    cast to bf16 for the MXU. W1 is zero-padded from 784 to 896 input rows.
    Biases stay f32 (bias add happens after the f32 accumulation).
    """
    dims = [(INPUT_SIZE, H1), (H1, H2), (H2, H3)]
    params = []
    for (fan_in, fan_out) in dims:
        key, kw, kb = jax.random.split(key, 3)
        bound = 1.0 / jnp.sqrt(fan_in)
        w = jax.random.uniform(kw, (fan_in, fan_out), jnp.float32, -bound, bound)
        b = jax.random.uniform(kb, (1, fan_out), jnp.float32, -bound, bound)
        if fan_in == INPUT_SIZE:
            w = jnp.pad(w, ((0, PADDED_INPUT - INPUT_SIZE), (0, 0)))  # zero K-pad
        params += [w.astype(jnp.bfloat16), b]
    # linear4 (128 -> 10) is unused by forward(); intentionally not materialized.
    return tuple(params)


def reference_forward_bf16(x, params):
    """Pure-JAX reference with the same bf16-operand / f32-accumulate recipe."""
    w1, b1, w2, b2, w3, b3 = params
    xp = jnp.pad(x, ((0, 0), (0, PADDED_INPUT - x.shape[1]))).astype(jnp.bfloat16)
    h = jnp.maximum(jnp.dot(xp, w1, preferred_element_type=jnp.float32) + b1, 0.0)
    h = h.astype(jnp.bfloat16)
    h = jnp.maximum(jnp.dot(h, w2, preferred_element_type=jnp.float32) + b2, 0.0)
    h = h.astype(jnp.bfloat16)
    h = jnp.maximum(jnp.dot(h, w3, preferred_element_type=jnp.float32) + b3, 0.0)
    return h  # dropout p=0.0 is identity


def reference_forward_f32(x, params):
    """Full-precision reference (module semantics), for a loose sanity check."""
    w1, b1, w2, b2, w3, b3 = params
    w1 = w1.astype(jnp.float32)[:INPUT_SIZE]
    w2 = w2.astype(jnp.float32)
    w3 = w3.astype(jnp.float32)
    h = jnp.maximum(x @ w1 + b1, 0.0)
    h = jnp.maximum(h @ w2 + b2, 0.0)
    h = jnp.maximum(h @ w3 + b3, 0.0)
    return h


if __name__ == "__main__":
    key = jax.random.PRNGKey(0)
    key, kx = jax.random.split(key)

    B = 8  # small test batch (wrapper pads to a 16-row tile internally)
    x = jax.random.normal(kx, (B, INPUT_SIZE), jnp.float32)
    params = init_params(key)

    out = simple_fc_forward(x, params)
    out = jax.block_until_ready(out)
    assert out.shape == (B, H3), out.shape

    # Tight check against the same bf16/f32-accumulate recipe.
    ref_bf16 = reference_forward_bf16(x, params)
    assert jnp.allclose(out, ref_bf16, atol=1e-3, rtol=1e-3), "mismatch vs bf16 reference"

    # Loose sanity check against full-f32 module semantics (bf16 operand rounding).
    ref_f32 = reference_forward_f32(x, params)
    assert jnp.allclose(out, ref_f32, atol=5e-2, rtol=5e-2), "mismatch vs f32 reference"

    print("KERNEL_OK")
</pallas_src>

<mosaic_0001>
module attributes {stable_mosaic.version = 11 : i64} {
  func.func @_mlp_kernel(%arg0: i32, %arg1: memref<16x896xbf16, #tpu.memory_space<vmem>>, %arg2: memref<896x512xbf16, #tpu.memory_space<vmem>>, %arg3: memref<1x512xf32, #tpu.memory_space<vmem>>, %arg4: memref<512x256xbf16, #tpu.memory_space<vmem>>, %arg5: memref<1x256xf32, #tpu.memory_space<vmem>>, %arg6: memref<256x128xbf16, #tpu.memory_space<vmem>>, %arg7: memref<1x128xf32, #tpu.memory_space<vmem>>, %arg8: memref<16x128xf32, #tpu.memory_space<vmem>>) attributes {dimension_semantics = [#tpu.dimension_semantics<parallel>], iteration_bounds = array<i64: 1>, scalar_prefetch = 0 : i64, scratch_operands = 0 : i64, tpu.core_type = #tpu.core_type<tc>, window_params = [{transform_indices = @transform_0, window_bounds = array<i64: 16, 896>}, {pipeline_mode = #tpu.pipeline_mode<synchronous>, transform_indices = @transform_1, window_bounds = array<i64: 896, 512>}, {pipeline_mode = #tpu.pipeline_mode<synchronous>, transform_indices = @transform_2, window_bounds = array<i64: 1, 512>}, {pipeline_mode = #tpu.pipeline_mode<synchronous>, transform_indices = @transform_3, window_bounds = array<i64: 512, 256>}, {pipeline_mode = #tpu.pipeline_mode<synchronous>, transform_indices = @transform_4, window_bounds = array<i64: 1, 256>}, {pipeline_mode = #tpu.pipeline_mode<synchronous>, transform_indices = @transform_5, window_bounds = array<i64: 256, 128>}, {pipeline_mode = #tpu.pipeline_mode<synchronous>, transform_indices = @transform_6, window_bounds = array<i64: 1, 128>}, {transform_indices = @transform_7, window_bounds = array<i64: 16, 128>}]} {
    %c0 = arith.constant 0 : index
    %c0_0 = arith.constant 0 : index
    %0 = vector.load %arg1[%c0, %c0_0] : memref<16x896xbf16, #tpu.memory_space<vmem>>, vector<16x896xbf16>
    %c0_1 = arith.constant 0 : index
    %c0_2 = arith.constant 0 : index
    %1 = vector.load %arg2[%c0_1, %c0_2] : memref<896x512xbf16, #tpu.memory_space<vmem>>, vector<896x512xbf16>
    %cst = arith.constant dense<0.000000e+00> : vector<16x512xf32>
    %2 = tpu.matmul %0, %1, %cst {dimension_numbers = #tpu.dot_dimension_numbers<[1], [0], [0], [1], [0, 0, 1, 1], [], []>} : vector<16x896xbf16>, vector<896x512xbf16>, vector<16x512xf32> -> vector<16x512xf32>
    %c0_3 = arith.constant 0 : index
    %c0_4 = arith.constant 0 : index
    %3 = vector.load %arg3[%c0_3, %c0_4] : memref<1x512xf32, #tpu.memory_space<vmem>>, vector<1x512xf32>
    %4 = vector.broadcast %3 : vector<1x512xf32> to vector<16x512xf32>
    %5 = arith.addf %2, %4 : vector<16x512xf32>
    %cst_5 = arith.constant 0.000000e+00 : f32
    %6 = vector.broadcast %cst_5 : f32 to vector<16x512xf32>
    %7 = arith.maximumf %5, %6 : vector<16x512xf32>
    %8 = arith.truncf %7 : vector<16x512xf32> to vector<16x512xbf16>
    %c0_6 = arith.constant 0 : index
    %c0_7 = arith.constant 0 : index
    %9 = vector.load %arg4[%c0_6, %c0_7] : memref<512x256xbf16, #tpu.memory_space<vmem>>, vector<512x256xbf16>
    %cst_8 = arith.constant dense<0.000000e+00> : vector<16x256xf32>
    %10 = tpu.matmul %8, %9, %cst_8 {dimension_numbers = #tpu.dot_dimension_numbers<[1], [0], [0], [1], [0, 0, 1, 1], [], []>} : vector<16x512xbf16>, vector<512x256xbf16>, vector<16x256xf32> -> vector<16x256xf32>
    %c0_9 = arith.constant 0 : index
    %c0_10 = arith.constant 0 : index
    %11 = vector.load %arg5[%c0_9, %c0_10] : memref<1x256xf32, #tpu.memory_space<vmem>>, vector<1x256xf32>
    %12 = vector.broadcast %11 : vector<1x256xf32> to vector<16x256xf32>
    %13 = arith.addf %10, %12 : vector<16x256xf32>
    %cst_11 = arith.constant 0.000000e+00 : f32
    %14 = vector.broadcast %cst_11 : f32 to vector<16x256xf32>
    %15 = arith.maximumf %13, %14 : vector<16x256xf32>
    %16 = arith.truncf %15 : vector<16x256xf32> to vector<16x256xbf16>
    %c0_12 = arith.constant 0 : index
    %c0_13 = arith.constant 0 : index
    %17 = vector.load %arg6[%c0_12, %c0_13] : memref<256x128xbf16, #tpu.memory_space<vmem>>, vector<256x128xbf16>
    %cst_14 = arith.constant dense<0.000000e+00> : vector<16x128xf32>
    %18 = tpu.matmul %16, %17, %cst_14 {dimension_numbers = #tpu.dot_dimension_numbers<[1], [0], [0], [1], [0, 0, 1, 1], [], []>} : vector<16x256xbf16>, vector<256x128xbf16>, vector<16x128xf32> -> vector<16x128xf32>
    %c0_15 = arith.constant 0 : index
    %c0_16 = arith.constant 0 : index
    %19 = vector.load %arg7[%c0_15, %c0_16] : memref<1x128xf32, #tpu.memory_space<vmem>>, vector<1x128xf32>
    %20 = vector.broadcast %19 : vector<1x128xf32> to vector<16x128xf32>
    %21 = arith.addf %18, %20 : vector<16x128xf32>
    %cst_17 = arith.constant 0.000000e+00 : f32
    %22 = vector.broadcast %cst_17 : f32 to vector<16x128xf32>
    %23 = arith.maximumf %21, %22 : vector<16x128xf32>
    %c0_18 = arith.constant 0 : index
    %c0_19 = arith.constant 0 : index
    %24 = vector.load %arg8[%c0_18, %c0_19] : memref<16x128xf32, #tpu.memory_space<vmem>>, vector<16x128xf32>
    tpu.vector_store %arg8[%c0_18, %c0_19], %23 {strides = array<i32>} : memref<16x128xf32, #tpu.memory_space<vmem>>, vector<16x128xf32>,
    return
  }
  func.func @transform_0(%arg0: i32) -> (i32, i32) {
    %c0_i32 = arith.constant 0 : i32
    %c0_i32_0 = arith.constant 0 : i32
    return %arg0, %c0_i32 : i32, i32
  }
  func.func @transform_1(%arg0: i32) -> (i32, i32) {
    %c0_i32 = arith.constant 0 : i32
    %c0_i32_0 = arith.constant 0 : i32
    %c0_i32_1 = arith.constant 0 : i32
    return %c0_i32, %c0_i32_0 : i32, i32
  }
  func.func @transform_2(%arg0: i32) -> (i32, i32) {
    %c0_i32 = arith.constant 0 : i32
    %c0_i32_0 = arith.constant 0 : i32
    %c0_i32_1 = arith.constant 0 : i32
    return %c0_i32, %c0_i32_0 : i32, i32
  }
  func.func @transform_3(%arg0: i32) -> (i32, i32) {
    %c0_i32 = arith.constant 0 : i32
    %c0_i32_0 = arith.constant 0 : i32
    %c0_i32_1 = arith.constant 0 : i32
    return %c0_i32, %c0_i32_0 : i32, i32
  }
  func.func @transform_4(%arg0: i32) -> (i32, i32) {
    %c0_i32 = arith.constant 0 : i32
    %c0_i32_0 = arith.constant 0 : i32
    %c0_i32_1 = arith.constant 0 : i32
    return %c0_i32, %c0_i32_0 : i32, i32
  }
  func.func @transform_5(%arg0: i32) -> (i32, i32) {
    %c0_i32 = arith.constant 0 : i32
    %c0_i32_0 = arith.constant 0 : i32
    %c0_i32_1 = arith.constant 0 : i32
    return %c0_i32, %c0_i32_0 : i32, i32
  }
  func.func @transform_6(%arg0: i32) -> (i32, i32) {
    %c0_i32 = arith.constant 0 : i32
    %c0_i32_0 = arith.constant 0 : i32
    %c0_i32_1 = arith.constant 0 : i32
    return %c0_i32, %c0_i32_0 : i32, i32
  }
  func.func @transform_7(%arg0: i32) -> (i32, i32) {
    %c0_i32 = arith.constant 0 : i32
    %c0_i32_0 = arith.constant 0 : i32
    return %arg0, %c0_i32 : i32, i32
  }
}

</mosaic_0001>

<llo_original>
// kernel: simple_fc_forward.1
$region0: #{simple_fc_forward.1}
  #allocation0 [shape = 'u32[]', space=smem, size = 0x4, offset = 0x4, fixed_abs, tag = 'smem constant byte address 0x4 - core index']
  #allocation1 [shape = 'u32[144,128]{1,0:T(1,128)}', space=vmem, size = 0x12000, scoped, tag = 'internal scratch']
  %s0 = inlined_call_operand.vmem [shape: bf16[16,896], index: 0, kind: input, shape index: {}]
  %s1 = inlined_call_operand.hbm [shape: bf16[896,512], index: 1, kind: input, shape index: {}]
  %s2 = inlined_call_operand.vmem [shape: f32[1,512], index: 2, kind: input, shape index: {}]
  %s3 = inlined_call_operand.hbm [shape: bf16[512,256], index: 3, kind: input, shape index: {}]
  %s4 = inlined_call_operand.vmem [shape: f32[1,256], index: 4, kind: input, shape index: {}]
  %s5 = inlined_call_operand.vmem [shape: bf16[256,128], index: 5, kind: input, shape index: {}]
  %s6 = inlined_call_operand.vmem [shape: f32[1,128], index: 6, kind: input, shape index: {}]
  %s7 = inlined_call_operand.vmem [shape: f32[16,128], index: 7, kind: output, shape index: {}]
  %s8 = sld [smem:[#allocation0]]
  $region46: #{simple_fc_forward.1} parent=0
    _
  %s10 = ssub.s32 1, %s8
  %s11 = scalar_select 0, %s10, %s8
  $region1: #{simple_fc_forward.1} parent=0
    #allocation2 [shape = 'u8[917504]{0}', space=vmem, size = 0xe0000, scoped, tag = 'input window, operand 1, single buffered']
    #allocation3 [shape = 's32[1]{0}', space=sflag, size = 0x4, scoped, tag = 'scoped memory for simple_fc_forward.1']
    #allocation4 [shape = 'u8[262144]{0}', space=vmem, size = 0x40000, scoped, tag = 'input window, operand 3, single buffered']
    #allocation5 [shape = 's32[1]{0}', space=sflag, size = 0x4, scoped, tag = 'scoped memory for simple_fc_forward.1']
    %12 = vsyncpa [#allocation3], 0
    %13 = vsyncpa [#allocation5], 0
    // Predicated region
    $region2: #{simple_fc_forward.1} parent=1 // pred_check
      _
    $region3: #{simple_fc_forward.1} parent=1 // pred_check_branch
      %15 = sbr.rel (0) target = $region5
    $region4: #{simple_fc_forward.1} parent=1 // pred_region
      _
    $region5: #{simple_fc_forward.1} parent=1 // pred_fallthru
      _
    // Predicated region
    $region6: #{simple_fc_forward.1} parent=1 // pred_check
      _
    $region7: #{simple_fc_forward.1} parent=1 // pred_check_branch
      %17 = sbr.rel (0) target = $region9
    $region8: #{simple_fc_forward.1} parent=1 // pred_region
      %s19 = ssub.s32 28672, 28672
      %20 = vsyncadd [#allocation3], %s19
      %s21 = sshll.u32 [#allocation2], 4
      %s22 = int_to_ptr.vmem [resolvable:$true] %s21
      %27 = dma.hbm_to_vmem [thread:$0]  %s1, 28672, %s22, [#allocation3], 256, 256, 16
    $region9: #{simple_fc_forward.1} parent=1 // pred_fallthru
      _
    // Predicated region
    $region10: #{simple_fc_forward.1} parent=1 // pred_check
      _
    $region11: #{simple_fc_forward.1} parent=1 // pred_check_branch
      %29 = sbr.rel (0) target = $region13
    $region12: #{simple_fc_forward.1} parent=1 // pred_region
      _
    $region13: #{simple_fc_forward.1} parent=1 // pred_fallthru
      _
    // Predicated region
    $region14: #{simple_fc_forward.1} parent=1 // pred_check
      _
    $region15: #{simple_fc_forward.1} parent=1 // pred_check_branch
      %31 = sbr.rel (0) target = $region17
    $region16: #{simple_fc_forward.1} parent=1 // pred_region
      %s33 = ssub.s32 8192, 8192
      %34 = vsyncadd [#allocation5], %s33
      %s35 = sshll.u32 [#allocation4], 4
      %s36 = int_to_ptr.vmem [resolvable:$true] %s35
      %41 = dma.hbm_to_vmem [thread:$0]  %s3, 8192, %s36, [#allocation5], 128, 128, 8
    $region17: #{simple_fc_forward.1} parent=1 // pred_fallthru
      _
    // Predicated region
    $region18: #{simple_fc_forward.1} parent=1 // pred_check
      _
    $region19: #{simple_fc_forward.1} parent=1 // pred_check_branch
      %43 = sbr.rel (0) target = $region21
    $region20: #{simple_fc_forward.1} parent=1 // pred_region
      _
    $region21: #{simple_fc_forward.1} parent=1 // pred_fallthru
      _
    // Predicated region
    $region22: #{simple_fc_forward.1} parent=1 // pred_check
      _
    $region23: #{simple_fc_forward.1} parent=1 // pred_check_branch
      %45 = sbr.rel (0) target = $region25
    $region24: #{simple_fc_forward.1} parent=1 // pred_region
      _
    $region25: #{simple_fc_forward.1} parent=1 // pred_fallthru
      _
    // Predicated region
    $region26: #{simple_fc_forward.1} parent=1 // pred_check
      _
    $region27: #{simple_fc_forward.1} parent=1 // pred_check_branch
      %47 = sbr.rel (0) target = $region29
    $region28: #{simple_fc_forward.1} parent=1 // pred_region
      _
    $region29: #{simple_fc_forward.1} parent=1 // pred_fallthru
      _
    // Predicated region
    $region30: #{simple_fc_forward.1} parent=1 // pred_check
      _
    $region31: #{simple_fc_forward.1} parent=1 // pred_check_branch
      %49 = sbr.rel (0) target = $region33
    $region32: #{simple_fc_forward.1} parent=1 // pred_region
      %50 = dma.done [#allocation3], 28672
    $region33: #{simple_fc_forward.1} parent=1 // pred_fallthru
      _
    // Predicated region
    $region34: #{simple_fc_forward.1} parent=1 // pred_check
      _
    $region35: #{simple_fc_forward.1} parent=1 // pred_check_branch
      %52 = sbr.rel (0) target = $region37
    $region36: #{simple_fc_forward.1} parent=1 // pred_region
      %53 = dma.done [#allocation5], 8192
    $region37: #{simple_fc_forward.1} parent=1 // pred_fallthru
      _
    %v55 = vld [vmem:[%s0] sm:$0xff]
    %v56 = vld [vmem:[%s0 + $0x8] sm:$0xff]
    %v57 = vld [vmem:[%s0 + $0x10] sm:$0xff]
    %v58 = vld [vmem:[%s0 + $0x18] sm:$0xf]
    %v59 = vld [vmem:[%s0 + $0x1c] sm:$0xff]
    %v60 = vld [vmem:[%s0 + $0x24] sm:$0xff]
    %v61 = vld [vmem:[%s0 + $0x2c] sm:$0xff]
    %v62 = vld [vmem:[%s0 + $0x34] sm:$0xf]
    %v63 = vld [vmem:[#allocation2] sm:$0xff]
    %v64 = vld [vmem:[#allocation2 + $0x8] sm:$0xff]
    %v65 = vld [vmem:[#allocation2 + $0x10] sm:$0xff]
    %v66 = vld [vmem:[#allocation2 + $0x18] sm:$0xff]
    %v67 = vld [vmem:[#allocation2 + $0x20] sm:$0xff]
    %v68 = vld [vmem:[#allocation2 + $0x28] sm:$0xff]
    %v69 = vld [vmem:[#allocation2 + $0x30] sm:$0xff]
    %v70 = vld [vmem:[#allocation2 + $0x38] sm:$0xff]
    %v71 = vld [vmem:[#allocation2 + $0x40] sm:$0xff]
    %v72 = vld [vmem:[#allocation2 + $0x48] sm:$0xff]
    %v73 = vld [vmem:[#allocation2 + $0x50] sm:$0xff]
    %v74 = vld [vmem:[#allocation2 + $0x58] sm:$0xff]
    %v75 = vld [vmem:[#allocation2 + $0x60] sm:$0xff]
    %v76 = vld [vmem:[#allocation2 + $0x68] sm:$0xff]
    %v77 = vld [vmem:[#allocation2 + $0x70] sm:$0xff]
    %v78 = vld [vmem:[#allocation2 + $0x78] sm:$0xff]
    %v79 = vld [vmem:[#allocation2 + $0x80] sm:$0xff]
    %v80 = vld [vmem:[#allocation2 + $0x88] sm:$0xff]
    %v81 = vld [vmem:[#allocation2 + $0x90] sm:$0xff]
    %v82 = vld [vmem:[#allocation2 + $0x98] sm:$0xff]
    %v83 = vld [vmem:[#allocation2 + $0xa0] sm:$0xff]
    %v84 = vld [vmem:[#allocation2 + $0xa8] sm:$0xff]
    %v85 = vld [vmem:[#allocation2 + $0xb0] sm:$0xff]
    %v86 = vld [vmem:[#allocation2 + $0xb8] sm:$0xff]
    %v87 = vld [vmem:[#allocation2 + $0xc0] sm:$0xff]
    %v88 = vld [vmem:[#allocation2 + $0xc8] sm:$0xff]
    %v89 = vld [vmem:[#allocation2 + $0xd0] sm:$0xff]
    %v90 = vld [vmem:[#allocation2 + $0xd8] sm:$0xff]
    %v91 = vld [vmem:[#allocation2 + $0xe0] sm:$0xff]
    %v92 = vld [vmem:[#allocation2 + $0xe8] sm:$0xff]
    %v93 = vld [vmem:[#allocation2 + $0xf0] sm:$0xff]
    %v94 = vld [vmem:[#allocation2 + $0xf8] sm:$0xff]
    %v95 = vld [vmem:[#allocation2 + $0x100] sm:$0xff]
    %v96 = vld [vmem:[#allocation2 + $0x108] sm:$0xff]
    %v97 = vld [vmem:[#allocation2 + $0x110] sm:$0xff]
    %v98 = vld [vmem:[#allocation2 + $0x118] sm:$0xff]
    %v99 = vld [vmem:[#allocation2 + $0x120] sm:$0xff]
    %v100 = vld [vmem:[#allocation2 + $0x128] sm:$0xff]
    %v101 = vld [vmem:[#allocation2 + $0x130] sm:$0xff]
    %v102 = vld [vmem:[#allocation2 + $0x138] sm:$0xff]
    %v103 = vld [vmem:[#allocation2 + $0x140] sm:$0xff]
    %v104 = vld [vmem:[#allocation2 + $0x148] sm:$0xff]
    %v105 = vld [vmem:[#allocation2 + $0x150] sm:$0xff]
    %v106 = vld [vmem:[#allocation2 + $0x158] sm:$0xff]
    %v107 = vld [vmem:[#allocation2 + $0x160] sm:$0xff]
    %v108 = vld [vmem:[#allocation2 + $0x168] sm:$0xff]
    %v109 = vld [vmem:[#allocation2 + $0x170] sm:$0xff]
    %v110 = vld [vmem:[#allocation2 + $0x178] sm:$0xff]
    %v111 = vld [vmem:[#allocation2 + $0x180] sm:$0xff]
    %v112 = vld [vmem:[#allocation2 + $0x188] sm:$0xff]
    %v113 = vld [vmem:[#allocation2 + $0x190] sm:$0xff]
    %v114 = vld [vmem:[#allocation2 + $0x198] sm:$0xff]
    %v115 = vld [vmem:[#allocation2 + $0x1a0] sm:$0xff]
    %v116 = vld [vmem:[#allocation2 + $0x1a8] sm:$0xff]
    %v117 = vld [vmem:[#allocation2 + $0x1b0] sm:$0xff]
    %v118 = vld [vmem:[#allocation2 + $0x1b8] sm:$0xff]
    %v119 = vld [vmem:[#allocation2 + $0x1c0] sm:$0xff]
    %v120 = vld [vmem:[#allocation2 + $0x1c8] sm:$0xff]
    %v121 = vld [vmem:[#allocation2 + $0x1d0] sm:$0xff]
    %v122 = vld [vmem:[#allocation2 + $0x1d8] sm:$0xff]
    %v123 = vld [vmem:[#allocation2 + $0x1e0] sm:$0xff]
    %v124 = vld [vmem:[#allocation2 + $0x1e8] sm:$0xff]
    %v125 = vld [vmem:[#allocation2 + $0x1f0] sm:$0xff]
    %v126 = vld [vmem:[#allocation2 + $0x1f8] sm:$0xff]
    %v127 = vld [vmem:[#allocation2 + $0x200] sm:$0xff]
    %v128 = vld [vmem:[#allocation2 + $0x208] sm:$0xff]
    %v129 = vld [vmem:[#allocation2 + $0x210] sm:$0xff]
    %v130 = vld [vmem:[#allocation2 + $0x218] sm:$0xff]
    %v131 = vld [vmem:[#allocation2 + $0x220] sm:$0xff]
    %v132 = vld [vmem:[#allocation2 + $0x228] sm:$0xff]
    %v133 = vld [vmem:[#allocation2 + $0x230] sm:$0xff]
    %v134 = vld [vmem:[#allocation2 + $0x238] sm:$0xff]
    %v135 = vld [vmem:[#allocation2 + $0x240] sm:$0xff]
    %v136 = vld [vmem:[#allocation2 + $0x248] sm:$0xff]
    %v137 = vld [vmem:[#allocation2 + $0x250] sm:$0xff]
    %v138 = vld [vmem:[#allocation2 + $0x258] sm:$0xff]
    %v139 = vld [vmem:[#allocation2 + $0x260] sm:$0xff]
    %v140 = vld [vmem:[#allocation2 + $0x268] sm:$0xff]
    %v141 = vld [vmem:[#allocation2 + $0x270] sm:$0xff]
    %v142 = vld [vmem:[#allocation2 + $0x278] sm:$0xff]
    %v143 = vld [vmem:[#allocation2 + $0x280] sm:$0xff]
    %v144 = vld [vmem:[#allocation2 + $0x288] sm:$0xff]
    %v145 = vld [vmem:[#allocation2 + $0x290] sm:$0xff]
    %v146 = vld [vmem:[#allocation2 + $0x298] sm:$0xff]
    %v147 = vld [vmem:[#allocation2 + $0x2a0] sm:$0xff]
    %v148 = vld [vmem:[#allocation2 + $0x2a8] sm:$0xff]
    %v149 = vld [vmem:[#allocation2 + $0x2b0] sm:$0xff]
    %v150 = vld [vmem:[#allocation2 + $0x2b8] sm:$0xff]
    %v151 = vld [vmem:[#allocation2 + $0x2c0] sm:$0xff]
    %v152 = vld [vmem:[#allocation2 + $0x2c8] sm:$0xff]
    %v153 = vld [vmem:[#allocation2 + $0x2d0] sm:$0xff]
    %v154 = vld [vmem:[#allocation2 + $0x2d8] sm:$0xff]
    %v155 = vld [vmem:[#allocation2 + $0x2e0] sm:$0xff]
    %v156 = vld [vmem:[#allocation2 + $0x2e8] sm:$0xff]
    %v157 = vld [vmem:[#allocation2 + $0x2f0] sm:$0xff]
    %v158 = vld [vmem:[#allocation2 + $0x2f8] sm:$0xff]
    %v159 = vld [vmem:[#allocation2 + $0x300] sm:$0xff]
    %v160 = vld [vmem:[#allocation2 + $0x308] sm:$0xff]
    %v161 = vld [vmem:[#allocation2 + $0x310] sm:$0xff]
    %v162 = vld [vmem:[#allocation2 + $0x318] sm:$0xff]
    %v163 = vld [vmem:[#allocation2 + $0x320] sm:$0xff]
    %v164 = vld [vmem:[#allocation2 + $0x328] sm:$0xff]
    %v165 = vld [vmem:[#allocation2 + $0x330] sm:$0xff]
    %v166 = vld [vmem:[#allocation2 + $0x338] sm:$0xff]
    %v167 = vld [vmem:[#allocation2 + $0x340] sm:$0xff]
    %v168 = vld [vmem:[#allocation2 + $0x348] sm:$0xff]
    %v169 = vld [vmem:[#allocation2 + $0x350] sm:$0xff]
    %v170 = vld [vmem:[#allocation2 + $0x358] sm:$0xff]
    %v171 = vld [vmem:[#allocation2 + $0x360] sm:$0xff]
    %v172 = vld [vmem:[#allocation2 + $0x368] sm:$0xff]
    %v173 = vld [vmem:[#allocation2 + $0x370] sm:$0xff]
    %v174 = vld [vmem:[#allocation2 + $0x378] sm:$0xff]
    %v175 = vld [vmem:[#allocation2 + $0x380] sm:$0xff]
    %v176 = vld [vmem:[#allocation2 + $0x388] sm:$0xff]
    %v177 = vld [vmem:[#allocation2 + $0x390] sm:$0xff]
    %v178 = vld [vmem:[#allocation2 + $0x398] sm:$0xff]
    %v179 = vld [vmem:[#allocation2 + $0x3a0] sm:$0xff]
    %v180 = vld [vmem:[#allocation2 + $0x3a8] sm:$0xff]
    %v181 = vld [vmem:[#allocation2 + $0x3b0] sm:$0xff]
    %v182 = vld [vmem:[#allocation2 + $0x3b8] sm:$0xff]
    %v183 = vld [vmem:[#allocation2 + $0x3c0] sm:$0xff]
    %v184 = vld [vmem:[#allocation2 + $0x3c8] sm:$0xff]
    %v185 = vld [vmem:[#allocation2 + $0x3d0] sm:$0xff]
    %v186 = vld [vmem:[#allocation2 + $0x3d8] sm:$0xff]
    %v187 = vld [vmem:[#allocation2 + $0x3e0] sm:$0xff]
    %v188 = vld [vmem:[#allocation2 + $0x3e8] sm:$0xff]
    %v189 = vld [vmem:[#allocation2 + $0x3f0] sm:$0xff]
    %v190 = vld [vmem:[#allocation2 + $0x3f8] sm:$0xff]
    %v191 = vld [vmem:[#allocation2 + $0x400] sm:$0xff]
    %v192 = vld [vmem:[#allocation2 + $0x408] sm:$0xff]
    %v193 = vld [vmem:[#allocation2 + $0x410] sm:$0xff]
    %v194 = vld [vmem:[#allocation2 + $0x418] sm:$0xff]
    %v195 = vld [vmem:[#allocation2 + $0x420] sm:$0xff]
    %v196 = vld [vmem:[#allocation2 + $0x428] sm:$0xff]
    %v197 = vld [vmem:[#allocation2 + $0x430] sm:$0xff]
    %v198 = vld [vmem:[#allocation2 + $0x438] sm:$0xff]
    %v199 = vld [vmem:[#allocation2 + $0x440] sm:$0xff]
    %v200 = vld [vmem:[#allocation2 + $0x448] sm:$0xff]
    %v201 = vld [vmem:[#allocation2 + $0x450] sm:$0xff]
    %v202 = vld [vmem:[#allocation2 + $0x458] sm:$0xff]
    %v203 = vld [vmem:[#allocation2 + $0x460] sm:$0xff]
    %v204 = vld [vmem:[#allocation2 + $0x468] sm:$0xff]
    %v205 = vld [vmem:[#allocation2 + $0x470] sm:$0xff]
    %v206 = vld [vmem:[#allocation2 + $0x478] sm:$0xff]
    %v207 = vld [vmem:[#allocation2 + $0x480] sm:$0xff]
    %v208 = vld [vmem:[#allocation2 + $0x488] sm:$0xff]
    %v209 = vld [vmem:[#allocation2 + $0x490] sm:$0xff]
    %v210 = vld [vmem:[#allocation2 + $0x498] sm:$0xff]
    %v211 = vld [vmem:[#allocation2 + $0x4a0] sm:$0xff]
    %v212 = vld [vmem:[#allocation2 + $0x4a8] sm:$0xff]
    %v213 = vld [vmem:[#allocation2 + $0x4b0] sm:$0xff]
    %v214 = vld [vmem:[#allocation2 + $0x4b8] sm:$0xff]
    %v215 = vld [vmem:[#allocation2 + $0x4c0] sm:$0xff]
    %v216 = vld [vmem:[#allocation2 + $0x4c8] sm:$0xff]
    %v217 = vld [vmem:[#allocation2 + $0x4d0] sm:$0xff]
    %v218 = vld [vmem:[#allocation2 + $0x4d8] sm:$0xff]
    %v219 = vld [vmem:[#allocation2 + $0x4e0] sm:$0xff]
    %v220 = vld [vmem:[#allocation2 + $0x4e8] sm:$0xff]
    %v221 = vld [vmem:[#allocation2 + $0x4f0] sm:$0xff]
    %v222 = vld [vmem:[#allocation2 + $0x4f8] sm:$0xff]
    %v223 = vld [vmem:[#allocation2 + $0x500] sm:$0xff]
    %v224 = vld [vmem:[#allocation2 + $0x508] sm:$0xff]
    %v225 = vld [vmem:[#allocation2 + $0x510] sm:$0xff]
    %v226 = vld [vmem:[#allocation2 + $0x518] sm:$0xff]
    %v227 = vld [vmem:[#allocation2 + $0x520] sm:$0xff]
    %v228 = vld [vmem:[#allocation2 + $0x528] sm:$0xff]
    %v229 = vld [vmem:[#allocation2 + $0x530] sm:$0xff]
    %v230 = vld [vmem:[#allocation2 + $0x538] sm:$0xff]
    %v231 = vld [vmem:[#allocation2 + $0x540] sm:$0xff]
    %v232 = vld [vmem:[#allocation2 + $0x548] sm:$0xff]
    %v233 = vld [vmem:[#allocation2 + $0x550] sm:$0xff]
    %v234 = vld [vmem:[#allocation2 + $0x558] sm:$0xff]
    %v235 = vld [vmem:[#allocation2 + $0x560] sm:$0xff]
    %v236 = vld [vmem:[#allocation2 + $0x568] sm:$0xff]
    %v237 = vld [vmem:[#allocation2 + $0x570] sm:$0xff]
    %v238 = vld [vmem:[#allocation2 + $0x578] sm:$0xff]
    %v239 = vld [vmem:[#allocation2 + $0x580] sm:$0xff]
    %v240 = vld [vmem:[#allocation2 + $0x588] sm:$0xff]
    %v241 = vld [vmem:[#allocation2 + $0x590] sm:$0xff]
    %v242 = vld [vmem:[#allocation2 + $0x598] sm:$0xff]
    %v243 = vld [vmem:[#allocation2 + $0x5a0] sm:$0xff]
    %v244 = vld [vmem:[#allocation2 + $0x5a8] sm:$0xff]
    %v245 = vld [vmem:[#allocation2 + $0x5b0] sm:$0xff]
    %v246 = vld [vmem:[#allocation2 + $0x5b8] sm:$0xff]
    %v247 = vld [vmem:[#allocation2 + $0x5c0] sm:$0xff]
    %v248 = vld [vmem:[#allocation2 + $0x5c8] sm:$0xff]
    %v249 = vld [vmem:[#allocation2 + $0x5d0] sm:$0xff]
    %v250 = vld [vmem:[#allocation2 + $0x5d8] sm:$0xff]
    %v251 = vld [vmem:[#allocation2 + $0x5e0] sm:$0xff]
    %v252 = vld [vmem:[#allocation2 + $0x5e8] sm:$0xff]
    %v253 = vld [vmem:[#allocation2 + $0x5f0] sm:$0xff]
    %v254 = vld [vmem:[#allocation2 + $0x5f8] sm:$0xff]
    %v255 = vld [vmem:[#allocation2 + $0x600] sm:$0xff]
    %v256 = vld [vmem:[#allocation2 + $0x608] sm:$0xff]
    %v257 = vld [vmem:[#allocation2 + $0x610] sm:$0xff]
    %v258 = vld [vmem:[#allocation2 + $0x618] sm:$0xff]
    %v259 = vld [vmem:[#allocation2 + $0x620] sm:$0xff]
    %v260 = vld [vmem:[#allocation2 + $0x628] sm:$0xff]
    %v261 = vld [vmem:[#allocation2 + $0x630] sm:$0xff]
    %v262 = vld [vmem:[#allocation2 + $0x638] sm:$0xff]
    %v263 = vld [vmem:[#allocation2 + $0x640] sm:$0xff]
    %v264 = vld [vmem:[#allocation2 + $0x648] sm:$0xff]
    %v265 = vld [vmem:[#allocation2 + $0x650] sm:$0xff]
    %v266 = vld [vmem:[#allocation2 + $0x658] sm:$0xff]
    %v267 = vld [vmem:[#allocation2 + $0x660] sm:$0xff]
    %v268 = vld [vmem:[#allocation2 + $0x668] sm:$0xff]
    %v269 = vld [vmem:[#allocation2 + $0x670] sm:$0xff]
    %v270 = vld [vmem:[#allocation2 + $0x678] sm:$0xff]
    %v271 = vld [vmem:[#allocation2 + $0x680] sm:$0xff]
    %v272 = vld [vmem:[#allocation2 + $0x688] sm:$0xff]
    %v273 = vld [vmem:[#allocation2 + $0x690] sm:$0xff]
    %v274 = vld [vmem:[#allocation2 + $0x698] sm:$0xff]
    %v275 = vld [vmem:[#allocation2 + $0x6a0] sm:$0xff]
    %v276 = vld [vmem:[#allocation2 + $0x6a8] sm:$0xff]
    %v277 = vld [vmem:[#allocation2 + $0x6b0] sm:$0xff]
    %v278 = vld [vmem:[#allocation2 + $0x6b8] sm:$0xff]
    %v279 = vld [vmem:[#allocation2 + $0x6c0] sm:$0xff]
    %v280 = vld [vmem:[#allocation2 + $0x6c8] sm:$0xff]
    %v281 = vld [vmem:[#allocation2 + $0x6d0] sm:$0xff]
    %v282 = vld [vmem:[#allocation2 + $0x6d8] sm:$0xff]
    %v283 = vld [vmem:[#allocation2 + $0x6e0] sm:$0xff]
    %v284 = vld [vmem:[#allocation2 + $0x6e8] sm:$0xff]
    %v285 = vld [vmem:[#allocation2 + $0x6f0] sm:$0xff]
    %v286 = vld [vmem:[#allocation2 + $0x6f8] sm:$0xff]
    %v287 = vld [vmem:[%s2] sm:$0xf]
    %v289 = vlaneseq
    %v290 = vshrl.u32 %v289, 7
    %v291 = vsub.s32 0, %v290
    %v292 = vrot.slane %v287, %v291
    %v293 = vlaneseq
    %v294 = vshrl.u32 %v293, 7
    %v295 = vsub.s32 1, %v294
    %v296 = vrot.slane %v287, %v295
    %v297 = vlaneseq
    %v298 = vshrl.u32 %v297, 7
    %v299 = vsub.s32 2, %v298
    %v300 = vrot.slane %v287, %v299
    %v301 = vlaneseq
    %v302 = vshrl.u32 %v301, 7
    %v303 = vsub.s32 3, %v302
    %v304 = vrot.slane %v287, %v303
    %v317 = vunpack.c.l.b16 %v55
    %v318 = vunpack.c.h.b16 %v55
    %v319 = vunpack.c.l.b16 %v56
    %v320 = vunpack.c.h.b16 %v56
    %v321 = vunpack.c.l.b16 %v57
    %v322 = vunpack.c.h.b16 %v57
    %v323 = vunpack.c.l.b16 %v58
    %v324 = vunpack.c.l.b16 %v59
    %v325 = vunpack.c.h.b16 %v59
    %v326 = vunpack.c.l.b16 %v60
    %v327 = vunpack.c.h.b16 %v60
    %v328 = vunpack.c.l.b16 %v61
    %v329 = vunpack.c.h.b16 %v61
    %v330 = vunpack.c.l.b16 %v62
    %v331 = vpack.c.b16 %v324, %v317
    %v332 = vpack.c.b16 %v325, %v318
    %v333 = vpack.c.b16 %v326, %v319
    %v334 = vpack.c.b16 %v327, %v320
    %v335 = vpack.c.b16 %v328, %v321
    %v336 = vpack.c.b16 %v329, %v322
    %v337 = vpack.c.b16 %v330, %v323
    %v569 = vunpack.c.l.b16 %v63
    %v570 = vunpack.c.h.b16 %v63
    %v571 = vunpack.c.l.b16 %v64
    %v572 = vunpack.c.h.b16 %v64
    %v573 = vunpack.c.l.b16 %v65
    %v574 = vunpack.c.h.b16 %v65
    %v575 = vunpack.c.l.b16 %v66
    %v576 = vunpack.c.h.b16 %v66
    %v577 = vunpack.c.l.b16 %v67
    %v578 = vunpack.c.h.b16 %v67
    %v579 = vunpack.c.l.b16 %v68
    %v580 = vunpack.c.h.b16 %v68
    %v581 = vunpack.c.l.b16 %v69
    %v582 = vunpack.c.h.b16 %v69
    %v583 = vunpack.c.l.b16 %v70
    %v584 = vunpack.c.h.b16 %v70
    %v585 = vunpack.c.l.b16 %v71
    %v586 = vunpack.c.h.b16 %v71
    %v587 = vunpack.c.l.b16 %v72
    %v588 = vunpack.c.h.b16 %v72
    %v589 = vunpack.c.l.b16 %v73
    %v590 = vunpack.c.h.b16 %v73
    %v591 = vunpack.c.l.b16 %v74
    %v592 = vunpack.c.h.b16 %v74
    %v593 = vunpack.c.l.b16 %v75
    %v594 = vunpack.c.h.b16 %v75
    %v595 = vunpack.c.l.b16 %v76
    %v596 = vunpack.c.h.b16 %v76
    %v597 = vunpack.c.l.b16 %v77
    %v598 = vunpack.c.h.b16 %v77
    %v599 = vunpack.c.l.b16 %v78
    %v600 = vunpack.c.h.b16 %v78
    %v601 = vunpack.c.l.b16 %v79
    %v602 = vunpack.c.h.b16 %v79
    %v603 = vunpack.c.l.b16 %v80
    %v604 = vunpack.c.h.b16 %v80
    %v605 = vunpack.c.l.b16 %v81
    %v606 = vunpack.c.h.b16 %v81
    %v607 = vunpack.c.l.b16 %v82
    %v608 = vunpack.c.h.b16 %v82
    %v609 = vunpack.c.l.b16 %v83
    %v610 = vunpack.c.h.b16 %v83
    %v611 = vunpack.c.l.b16 %v84
    %v612 = vunpack.c.h.b16 %v84
    %v613 = vunpack.c.l.b16 %v85
    %v614 = vunpack.c.h.b16 %v85
    %v615 = vunpack.c.l.b16 %v86
    %v616 = vunpack.c.h.b16 %v86
    %v617 = vunpack.c.l.b16 %v87
    %v618 = vunpack.c.h.b16 %v87
    %v619 = vunpack.c.l.b16 %v88
    %v620 = vunpack.c.h.b16 %v88
    %v621 = vunpack.c.l.b16 %v89
    %v622 = vunpack.c.h.b16 %v89
    %v623 = vunpack.c.l.b16 %v90
    %v624 = vunpack.c.h.b16 %v90
    %v625 = vunpack.c.l.b16 %v91
    %v626 = vunpack.c.h.b16 %v91
    %v627 = vunpack.c.l.b16 %v92
    %v628 = vunpack.c.h.b16 %v92
    %v629 = vunpack.c.l.b16 %v93
    %v630 = vunpack.c.h.b16 %v93
    %v631 = vunpack.c.l.b16 %v94
    %v632 = vunpack.c.h.b16 %v94
    %v633 = vunpack.c.l.b16 %v95
    %v634 = vunpack.c.h.b16 %v95
    %v635 = vunpack.c.l.b16 %v96
    %v636 = vunpack.c.h.b16 %v96
    %v637 = vunpack.c.l.b16 %v97
    %v638 = vunpack.c.h.b16 %v97
    %v639 = vunpack.c.l.b16 %v98
    %v640 = vunpack.c.h.b16 %v98
    %v641 = vunpack.c.l.b16 %v99
    %v642 = vunpack.c.h.b16 %v99
    %v643 = vunpack.c.l.b16 %v100
    %v644 = vunpack.c.h.b16 %v100
    %v645 = vunpack.c.l.b16 %v101
    %v646 = vunpack.c.h.b16 %v101
    %v647 = vunpack.c.l.b16 %v102
    %v648 = vunpack.c.h.b16 %v102
    %v649 = vunpack.c.l.b16 %v103
    %v650 = vunpack.c.h.b16 %v103
    %v651 = vunpack.c.l.b16 %v104
    %v652 = vunpack.c.h.b16 %v104
    %v653 = vunpack.c.l.b16 %v105
    %v654 = vunpack.c.h.b16 %v105
    %v655 = vunpack.c.l.b16 %v106
    %v656 = vunpack.c.h.b16 %v106
    %v657 = vunpack.c.l.b16 %v107
    %v658 = vunpack.c.h.b16 %v107
    %v659 = vunpack.c.l.b16 %v108
    %v660 = vunpack.c.h.b16 %v108
    %v661 = vunpack.c.l.b16 %v109
    %v662 = vunpack.c.h.b16 %v109
    %v663 = vunpack.c.l.b16 %v110
    %v664 = vunpack.c.h.b16 %v110
    %v665 = vunpack.c.l.b16 %v111
    %v666 = vunpack.c.h.b16 %v111
    %v667 = vunpack.c.l.b16 %v112
    %v668 = vunpack.c.h.b16 %v112
    %v669 = vunpack.c.l.b16 %v113
    %v670 = vunpack.c.h.b16 %v113
    %v671 = vunpack.c.l.b16 %v114
    %v672 = vunpack.c.h.b16 %v114
    %v673 = vunpack.c.l.b16 %v115
    %v674 = vunpack.c.h.b16 %v115
    %v675 = vunpack.c.l.b16 %v116
    %v676 = vunpack.c.h.b16 %v116
    %v677 = vunpack.c.l.b16 %v117
    %v678 = vunpack.c.h.b16 %v117
    %v679 = vunpack.c.l.b16 %v118
    %v680 = vunpack.c.h.b16 %v118
    %v681 = vunpack.c.l.b16 %v119
    %v682 = vunpack.c.h.b16 %v119
    %v683 = vunpack.c.l.b16 %v120
    %v684 = vunpack.c.h.b16 %v120
    %v685 = vunpack.c.l.b16 %v121
    %v686 = vunpack.c.h.b16 %v121
    %v687 = vunpack.c.l.b16 %v122
    %v688 = vunpack.c.h.b16 %v122
    %v689 = vunpack.c.l.b16 %v123
    %v690 = vunpack.c.h.b16 %v123
    %v691 = vunpack.c.l.b16 %v124
    %v692 = vunpack.c.h.b16 %v124
    %v693 = vunpack.c.l.b16 %v125
    %v694 = vunpack.c.h.b16 %v125
    %v695 = vunpack.c.l.b16 %v126
    %v696 = vunpack.c.h.b16 %v126
    %v697 = vunpack.c.l.b16 %v127
    %v698 = vunpack.c.h.b16 %v127
    %v699 = vunpack.c.l.b16 %v128
    %v700 = vunpack.c.h.b16 %v128
    %v701 = vunpack.c.l.b16 %v129
    %v702 = vunpack.c.h.b16 %v129
    %v703 = vunpack.c.l.b16 %v130
    %v704 = vunpack.c.h.b16 %v130
    %v705 = vunpack.c.l.b16 %v131
    %v706 = vunpack.c.h.b16 %v131
    %v707 = vunpack.c.l.b16 %v132
    %v708 = vunpack.c.h.b16 %v132
    %v709 = vunpack.c.l.b16 %v133
    %v710 = vunpack.c.h.b16 %v133
    %v711 = vunpack.c.l.b16 %v134
    %v712 = vunpack.c.h.b16 %v134
    %v713 = vunpack.c.l.b16 %v135
    %v714 = vunpack.c.h.b16 %v135
    %v715 = vunpack.c.l.b16 %v136
    %v716 = vunpack.c.h.b16 %v136
    %v717 = vunpack.c.l.b16 %v137
    %v718 = vunpack.c.h.b16 %v137
    %v719 = vunpack.c.l.b16 %v138
    %v720 = vunpack.c.h.b16 %v138
    %v721 = vunpack.c.l.b16 %v139
    %v722 = vunpack.c.h.b16 %v139
    %v723 = vunpack.c.l.b16 %v140
    %v724 = vunpack.c.h.b16 %v140
    %v725 = vunpack.c.l.b16 %v141
    %v726 = vunpack.c.h.b16 %v141
    %v727 = vunpack.c.l.b16 %v142
    %v728 = vunpack.c.h.b16 %v142
    %v729 = vunpack.c.l.b16 %v143
    %v730 = vunpack.c.h.b16 %v143
    %v731 = vunpack.c.l.b16 %v144
    %v732 = vunpack.c.h.b16 %v144
    %v733 = vunpack.c.l.b16 %v145
    %v734 = vunpack.c.h.b16 %v145
    %v735 = vunpack.c.l.b16 %v146
    %v736 = vunpack.c.h.b16 %v146
    %v737 = vunpack.c.l.b16 %v147
    %v738 = vunpack.c.h.b16 %v147
    %v739 = vunpack.c.l.b16 %v148
    %v740 = vunpack.c.h.b16 %v148
    %v741 = vunpack.c.l.b16 %v149
    %v742 = vunpack.c.h.b16 %v149
    %v743 = vunpack.c.l.b16 %v150
    %v744 = vunpack.c.h.b16 %v150
    %v745 = vunpack.c.l.b16 %v151
    %v746 = vunpack.c.h.b16 %v151
    %v747 = vunpack.c.l.b16 %v152
    %v748 = vunpack.c.h.b16 %v152
    %v749 = vunpack.c.l.b16 %v153
    %v750 = vunpack.c.h.b16 %v153
    %v751 = vunpack.c.l.b16 %v154
    %v752 = vunpack.c.h.b16 %v154
    %v753 = vunpack.c.l.b16 %v155
    %v754 = vunpack.c.h.b16 %v155
    %v755 = vunpack.c.l.b16 %v156
    %v756 = vunpack.c.h.b16 %v156
    %v757 = vunpack.c.l.b16 %v157
    %v758 = vunpack.c.h.b16 %v157
    %v759 = vunpack.c.l.b16 %v158
    %v760 = vunpack.c.h.b16 %v158
    %v761 = vunpack.c.l.b16 %v159
    %v762 = vunpack.c.h.b16 %v159
    %v763 = vunpack.c.l.b16 %v160
    %v764 = vunpack.c.h.b16 %v160
    %v765 = vunpack.c.l.b16 %v161
    %v766 = vunpack.c.h.b16 %v161
    %v767 = vunpack.c.l.b16 %v162
    %v768 = vunpack.c.h.b16 %v162
    %v769 = vunpack.c.l.b16 %v163
    %v770 = vunpack.c.h.b16 %v163
    %v771 = vunpack.c.l.b16 %v164
    %v772 = vunpack.c.h.b16 %v164
    %v773 = vunpack.c.l.b16 %v165
    %v774 = vunpack.c.h.b16 %v165
    %v775 = vunpack.c.l.b16 %v166
    %v776 = vunpack.c.h.b16 %v166
    %v777 = vunpack.c.l.b16 %v167
    %v778 = vunpack.c.h.b16 %v167
    %v779 = vunpack.c.l.b16 %v168
    %v780 = vunpack.c.h.b16 %v168
    %v781 = vunpack.c.l.b16 %v169
    %v782 = vunpack.c.h.b16 %v169
    %v783 = vunpack.c.l.b16 %v170
    %v784 = vunpack.c.h.b16 %v170
    %v785 = vunpack.c.l.b16 %v171
    %v786 = vunpack.c.h.b16 %v171
    %v787 = vunpack.c.l.b16 %v172
    %v788 = vunpack.c.h.b16 %v172
    %v789 = vunpack.c.l.b16 %v173
    %v790 = vunpack.c.h.b16 %v173
    %v791 = vunpack.c.l.b16 %v174
    %v792 = vunpack.c.h.b16 %v174
    %v793 = vunpack.c.l.b16 %v175
    %v794 = vunpack.c.h.b16 %v175
    %v795 = vunpack.c.l.b16 %v176
    %v796 = vunpack.c.h.b16 %v176
    %v797 = vunpack.c.l.b16 %v177
    %v798 = vunpack.c.h.b16 %v177
    %v799 = vunpack.c.l.b16 %v178
    %v800 = vunpack.c.h.b16 %v178
    %v801 = vunpack.c.l.b16 %v179
    %v802 = vunpack.c.h.b16 %v179
    %v803 = vunpack.c.l.b16 %v180
    %v804 = vunpack.c.h.b16 %v180
    %v805 = vunpack.c.l.b16 %v181
    %v806 = vunpack.c.h.b16 %v181
    %v807 = vunpack.c.l.b16 %v182
    %v808 = vunpack.c.h.b16 %v182
    %v809 = vunpack.c.l.b16 %v183
    %v810 = vunpack.c.h.b16 %v183
    %v811 = vunpack.c.l.b16 %v184
    %v812 = vunpack.c.h.b16 %v184
    %v813 = vunpack.c.l.b16 %v185
    %v814 = vunpack.c.h.b16 %v185
    %v815 = vunpack.c.l.b16 %v186
    %v816 = vunpack.c.h.b16 %v186
    %v817 = vunpack.c.l.b16 %v187
    %v818 = vunpack.c.h.b16 %v187
    %v819 = vunpack.c.l.b16 %v188
    %v820 = vunpack.c.h.b16 %v188
    %v821 = vunpack.c.l.b16 %v189
    %v822 = vunpack.c.h.b16 %v189
    %v823 = vunpack.c.l.b16 %v190
    %v824 = vunpack.c.h.b16 %v190
    %v825 = vunpack.c.l.b16 %v191
    %v826 = vunpack.c.h.b16 %v191
    %v827 = vunpack.c.l.b16 %v192
    %v828 = vunpack.c.h.b16 %v192
    %v829 = vunpack.c.l.b16 %v193
    %v830 = vunpack.c.h.b16 %v193
    %v831 = vunpack.c.l.b16 %v194
    %v832 = vunpack.c.h.b16 %v194
    %v833 = vunpack.c.l.b16 %v195
    %v834 = vunpack.c.h.b16 %v195
    %v835 = vunpack.c.l.b16 %v196
    %v836 = vunpack.c.h.b16 %v196
    %v837 = vunpack.c.l.b16 %v197
    %v838 = vunpack.c.h.b16 %v197
    %v839 = vunpack.c.l.b16 %v198
    %v840 = vunpack.c.h.b16 %v198
    %v841 = vunpack.c.l.b16 %v199
    %v842 = vunpack.c.h.b16 %v199
    %v843 = vunpack.c.l.b16 %v200
    %v844 = vunpack.c.h.b16 %v200
    %v845 = vunpack.c.l.b16 %v201
    %v846 = vunpack.c.h.b16 %v201
    %v847 = vunpack.c.l.b16 %v202
    %v848 = vunpack.c.h.b16 %v202
    %v849 = vunpack.c.l.b16 %v203
    %v850 = vunpack.c.h.b16 %v203
    %v851 = vunpack.c.l.b16 %v204
    %v852 = vunpack.c.h.b16 %v204
    %v853 = vunpack.c.l.b16 %v205
    %v854 = vunpack.c.h.b16 %v205
    %v855 = vunpack.c.l.b16 %v206
    %v856 = vunpack.c.h.b16 %v206
    %v857 = vunpack.c.l.b16 %v207
    %v858 = vunpack.c.h.b16 %v207
    %v859 = vunpack.c.l.b16 %v208
    %v860 = vunpack.c.h.b16 %v208
    %v861 = vunpack.c.l.b16 %v209
    %v862 = vunpack.c.h.b16 %v209
    %v863 = vunpack.c.l.b16 %v210
    %v864 = vunpack.c.h.b16 %v210
    %v865 = vunpack.c.l.b16 %v211
    %v866 = vunpack.c.h.b16 %v211
    %v867 = vunpack.c.l.b16 %v212
    %v868 = vunpack.c.h.b16 %v212
    %v869 = vunpack.c.l.b16 %v213
    %v870 = vunpack.c.h.b16 %v213
    %v871 = vunpack.c.l.b16 %v214
    %v872 = vunpack.c.h.b16 %v214
    %v873 = vunpack.c.l.b16 %v215
    %v874 = vunpack.c.h.b16 %v215
    %v875 = vunpack.c.l.b16 %v216
    %v876 = vunpack.c.h.b16 %v216
    %v877 = vunpack.c.l.b16 %v217
    %v878 = vunpack.c.h.b16 %v217
    %v879 = vunpack.c.l.b16 %v218
    %v880 = vunpack.c.h.b16 %v218
    %v881 = vunpack.c.l.b16 %v219
    %v882 = vunpack.c.h.b16 %v219
    %v883 = vunpack.c.l.b16 %v220
    %v884 = vunpack.c.h.b16 %v220
    %v885 = vunpack.c.l.b16 %v221
    %v886 = vunpack.c.h.b16 %v221
    %v887 = vunpack.c.l.b16 %v222
    %v888 = vunpack.c.h.b16 %v222
    %v889 = vunpack.c.l.b16 %v223
    %v890 = vunpack.c.h.b16 %v223
    %v891 = vunpack.c.l.b16 %v224
    %v892 = vunpack.c.h.b16 %v224
    %v893 = vunpack.c.l.b16 %v225
    %v894 = vunpack.c.h.b16 %v225
    %v895 = vunpack.c.l.b16 %v226
    %v896 = vunpack.c.h.b16 %v226
    %v897 = vunpack.c.l.b16 %v227
    %v898 = vunpack.c.h.b16 %v227
    %v899 = vunpack.c.l.b16 %v228
    %v900 = vunpack.c.h.b16 %v228
    %v901 = vunpack.c.l.b16 %v229
    %v902 = vunpack.c.h.b16 %v229
    %v903 = vunpack.c.l.b16 %v230
    %v904 = vunpack.c.h.b16 %v230
    %v905 = vunpack.c.l.b16 %v231
    %v906 = vunpack.c.h.b16 %v231
    %v907 = vunpack.c.l.b16 %v232
    %v908 = vunpack.c.h.b16 %v232
    %v909 = vunpack.c.l.b16 %v233
    %v910 = vunpack.c.h.b16 %v233
    %v911 = vunpack.c.l.b16 %v234
    %v912 = vunpack.c.h.b16 %v234
    %v913 = vunpack.c.l.b16 %v235
    %v914 = vunpack.c.h.b16 %v235
    %v915 = vunpack.c.l.b16 %v236
    %v916 = vunpack.c.h.b16 %v236
    %v917 = vunpack.c.l.b16 %v237
    %v918 = vunpack.c.h.b16 %v237
    %v919 = vunpack.c.l.b16 %v238
    %v920 = vunpack.c.h.b16 %v238
    %v921 = vunpack.c.l.b16 %v239
    %v922 = vunpack.c.h.b16 %v239
    %v923 = vunpack.c.l.b16 %v240
    %v924 = vunpack.c.h.b16 %v240
    %v925 = vunpack.c.l.b16 %v241
    %v926 = vunpack.c.h.b16 %v241
    %v927 = vunpack.c.l.b16 %v242
    %v928 = vunpack.c.h.b16 %v242
    %v929 = vunpack.c.l.b16 %v243
    %v930 = vunpack.c.h.b16 %v243
    %v931 = vunpack.c.l.b16 %v244
    %v932 = vunpack.c.h.b16 %v244
    %v933 = vunpack.c.l.b16 %v245
    %v934 = vunpack.c.h.b16 %v245
    %v935 = vunpack.c.l.b16 %v246
    %v936 = vunpack.c.h.b16 %v246
    %v937 = vunpack.c.l.b16 %v247
    %v938 = vunpack.c.h.b16 %v247
    %v939 = vunpack.c.l.b16 %v248
    %v940 = vunpack.c.h.b16 %v248
    %v941 = vunpack.c.l.b16 %v249
    %v942 = vunpack.c.h.b16 %v249
    %v943 = vunpack.c.l.b16 %v250
    %v944 = vunpack.c.h.b16 %v250
    %v945 = vunpack.c.l.b16 %v251
    %v946 = vunpack.c.h.b16 %v251
    %v947 = vunpack.c.l.b16 %v252
    %v948 = vunpack.c.h.b16 %v252
    %v949 = vunpack.c.l.b16 %v253
    %v950 = vunpack.c.h.b16 %v253
    %v951 = vunpack.c.l.b16 %v254
    %v952 = vunpack.c.h.b16 %v254
    %v953 = vunpack.c.l.b16 %v255
    %v954 = vunpack.c.h.b16 %v255
    %v955 = vunpack.c.l.b16 %v256
    %v956 = vunpack.c.h.b16 %v256
    %v957 = vunpack.c.l.b16 %v257
    %v958 = vunpack.c.h.b16 %v257
    %v959 = vunpack.c.l.b16 %v258
    %v960 = vunpack.c.h.b16 %v258
    %v961 = vunpack.c.l.b16 %v259
    %v962 = vunpack.c.h.b16 %v259
    %v963 = vunpack.c.l.b16 %v260
    %v964 = vunpack.c.h.b16 %v260
    %v965 = vunpack.c.l.b16 %v261
    %v966 = vunpack.c.h.b16 %v261
    %v967 = vunpack.c.l.b16 %v262
    %v968 = vunpack.c.h.b16 %v262
    %v969 = vunpack.c.l.b16 %v263
    %v970 = vunpack.c.h.b16 %v263
    %v971 = vunpack.c.l.b16 %v264
    %v972 = vunpack.c.h.b16 %v264
    %v973 = vunpack.c.l.b16 %v265
    %v974 = vunpack.c.h.b16 %v265
    %v975 = vunpack.c.l.b16 %v266
    %v976 = vunpack.c.h.b16 %v266
    %v977 = vunpack.c.l.b16 %v267
    %v978 = vunpack.c.h.b16 %v267
    %v979 = vunpack.c.l.b16 %v268
    %v980 = vunpack.c.h.b16 %v268
    %v981 = vunpack.c.l.b16 %v269
    %v982 = vunpack.c.h.b16 %v269
    %v983 = vunpack.c.l.b16 %v270
    %v984 = vunpack.c.h.b16 %v270
    %v985 = vunpack.c.l.b16 %v271
    %v986 = vunpack.c.h.b16 %v271
    %v987 = vunpack.c.l.b16 %v272
    %v988 = vunpack.c.h.b16 %v272
    %v989 = vunpack.c.l.b16 %v273
    %v990 = vunpack.c.h.b16 %v273
    %v991 = vunpack.c.l.b16 %v274
    %v992 = vunpack.c.h.b16 %v274
    %v993 = vunpack.c.l.b16 %v275
    %v994 = vunpack.c.h.b16 %v275
    %v995 = vunpack.c.l.b16 %v276
    %v996 = vunpack.c.h.b16 %v276
    %v997 = vunpack.c.l.b16 %v277
    %v998 = vunpack.c.h.b16 %v277
    %v999 = vunpack.c.l.b16 %v278
    %v1000 = vunpack.c.h.b16 %v278
    %v1001 = vunpack.c.l.b16 %v279
    %v1002 = vunpack.c.h.b16 %v279
    %v1003 = vunpack.c.l.b16 %v280
    %v1004 = vunpack.c.h.b16 %v280
    %v1005 = vunpack.c.l.b16 %v281
    %v1006 = vunpack.c.h.b16 %v281
    %v1007 = vunpack.c.l.b16 %v282
    %v1008 = vunpack.c.h.b16 %v282
    %v1009 = vunpack.c.l.b16 %v283
    %v1010 = vunpack.c.h.b16 %v283
    %v1011 = vunpack.c.l.b16 %v284
    %v1012 = vunpack.c.h.b16 %v284
    %v1013 = vunpack.c.l.b16 %v285
    %v1014 = vunpack.c.h.b16 %v285
    %v1015 = vunpack.c.l.b16 %v286
    %v1016 = vunpack.c.h.b16 %v286
    %v1017 = vpack.c.b16 %v573, %v569
    %v1018 = vpack.c.b16 %v574, %v570
    %v1019 = vpack.c.b16 %v575, %v571
    %v1020 = vpack.c.b16 %v576, %v572
    %v1021 = vpack.c.b16 %v581, %v577
    %v1022 = vpack.c.b16 %v582, %v578
    %v1023 = vpack.c.b16 %v583, %v579
    %v1024 = vpack.c.b16 %v584, %v580
    %v1025 = vpack.c.b16 %v589, %v585
    %v1026 = vpack.c.b16 %v590, %v586
    %v1027 = vpack.c.b16 %v591, %v587
    %v1028 = vpack.c.b16 %v592, %v588
    %v1029 = vpack.c.b16 %v597, %v593
    %v1030 = vpack.c.b16 %v598, %v594
    %v1031 = vpack.c.b16 %v599, %v595
    %v1032 = vpack.c.b16 %v600, %v596
    %v1033 = vpack.c.b16 %v605, %v601
    %v1034 = vpack.c.b16 %v606, %v602
    %v1035 = vpack.c.b16 %v607, %v603
    %v1036 = vpack.c.b16 %v608, %v604
    %v1037 = vpack.c.b16 %v613, %v609
    %v1038 = vpack.c.b16 %v614, %v610
    %v1039 = vpack.c.b16 %v615, %v611
    %v1040 = vpack.c.b16 %v616, %v612
    %v1041 = vpack.c.b16 %v621, %v617
    %v1042 = vpack.c.b16 %v622, %v618
    %v1043 = vpack.c.b16 %v623, %v619
    %v1044 = vpack.c.b16 %v624, %v620
    %v1045 = vpack.c.b16 %v629, %v625
    %v1046 = vpack.c.b16 %v630, %v626
    %v1047 = vpack.c.b16 %v631, %v627
    %v1048 = vpack.c.b16 %v632, %v628
    %v1049 = vpack.c.b16 %v637, %v633
    %v1050 = vpack.c.b16 %v638, %v634
    %v1051 = vpack.c.b16 %v639, %v635
    %v1052 = vpack.c.b16 %v640, %v636
    %v1053 = vpack.c.b16 %v645, %v641
    %v1054 = vpack.c.b16 %v646, %v642
    %v1055 = vpack.c.b16 %v647, %v643
    %v1056 = vpack.c.b16 %v648, %v644
    %v1057 = vpack.c.b16 %v653, %v649
    %v1058 = vpack.c.b16 %v654, %v650
    %v1059 = vpack.c.b16 %v655, %v651
    %v1060 = vpack.c.b16 %v656, %v652
    %v1061 = vpack.c.b16 %v661, %v657
    %v1062 = vpack.c.b16 %v662, %v658
    %v1063 = vpack.c.b16 %v663, %v659
    %v1064 = vpack.c.b16 %v664, %v660
    %v1065 = vpack.c.b16 %v669, %v665
    %v1066 = vpack.c.b16 %v670, %v666
    %v1067 = vpack.c.b16 %v671, %v667
    %v1068 = vpack.c.b16 %v672, %v668
    %v1069 = vpack.c.b16 %v677, %v673
    %v1070 = vpack.c.b16 %v678, %v674
    %v1071 = vpack.c.b16 %v679, %v675
    %v1072 = vpack.c.b16 %v680, %v676
    %v1073 = vpack.c.b16 %v685, %v681
    %v1074 = vpack.c.b16 %v686, %v682
    %v1075 = vpack.c.b16 %v687, %v683
    %v1076 = vpack.c.b16 %v688, %v684
    %v1077 = vpack.c.b16 %v693, %v689
    %v1078 = vpack.c.b16 %v694, %v690
    %v1079 = vpack.c.b16 %v695, %v691
    %v1080 = vpack.c.b16 %v696, %v692
    %v1081 = vpack.c.b16 %v701, %v697
    %v1082 = vpack.c.b16 %v702, %v698
    %v1083 = vpack.c.b16 %v703, %v699
    %v1084 = vpack.c.b16 %v704, %v700
    %v1085 = vpack.c.b16 %v709, %v705
    %v1086 = vpack.c.b16 %v710, %v706
    %v1087 = vpack.c.b16 %v711, %v707
    %v1088 = vpack.c.b16 %v712, %v708
    %v1089 = vpack.c.b16 %v717, %v713
    %v1090 = vpack.c.b16 %v718, %v714
    %v1091 = vpack.c.b16 %v719, %v715
    %v1092 = vpack.c.b16 %v720, %v716
    %v1093 = vpack.c.b16 %v725, %v721
    %v1094 = vpack.c.b16 %v726, %v722
    %v1095 = vpack.c.b16 %v727, %v723
    %v1096 = vpack.c.b16 %v728, %v724
    %v1097 = vpack.c.b16 %v733, %v729
    %v1098 = vpack.c.b16 %v734, %v730
    %v1099 = vpack.c.b16 %v735, %v731
    %v1100 = vpack.c.b16 %v736, %v732
    %v1101 = vpack.c.b16 %v741, %v737
    %v1102 = vpack.c.b16 %v742, %v738
    %v1103 = vpack.c.b16 %v743, %v739
    %v1104 = vpack.c.b16 %v744, %v740
    %v1105 = vpack.c.b16 %v749, %v745
    %v1106 = vpack.c.b16 %v750, %v746
    %v1107 = vpack.c.b16 %v751, %v747
    %v1108 = vpack.c.b16 %v752, %v748
    %v1109 = vpack.c.b16 %v757, %v753
    %v1110 = vpack.c.b16 %v758, %v754
    %v1111 = vpack.c.b16 %v759, %v755
    %v1112 = vpack.c.b16 %v760, %v756
    %v1113 = vpack.c.b16 %v765, %v761
    %v1114 = vpack.c.b16 %v766, %v762
    %v1115 = vpack.c.b16 %v767, %v763
    %v1116 = vpack.c.b16 %v768, %v764
    %v1117 = vpack.c.b16 %v773, %v769
    %v1118 = vpack.c.b16 %v774, %v770
    %v1119 = vpack.c.b16 %v775, %v771
    %v1120 = vpack.c.b16 %v776, %v772
    %v1121 = vpack.c.b16 %v781, %v777
    %v1122 = vpack.c.b16 %v782, %v778
    %v1123 = vpack.c.b16 %v783, %v779
    %v1124 = vpack.c.b16 %v784, %v780
    %v1125 = vpack.c.b16 %v789, %v785
    %v1126 = vpack.c.b16 %v790, %v786
    %v1127 = vpack.c.b16 %v791, %v787
    %v1128 = vpack.c.b16 %v792, %v788
    %v1129 = vpack.c.b16 %v797, %v793
    %v1130 = vpack.c.b16 %v798, %v794
    %v1131 = vpack.c.b16 %v799, %v795
    %v1132 = vpack.c.b16 %v800, %v796
    %v1133 = vpack.c.b16 %v805, %v801
    %v1134 = vpack.c.b16 %v806, %v802
    %v1135 = vpack.c.b16 %v807, %v803
    %v1136 = vpack.c.b16 %v808, %v804
    %v1137 = vpack.c.b16 %v813, %v809
    %v1138 = vpack.c.b16 %v814, %v810
    %v1139 = vpack.c.b16 %v815, %v811
    %v1140 = vpack.c.b16 %v816, %v812
    %v1141 = vpack.c.b16 %v821, %v817
    %v1142 = vpack.c.b16 %v822, %v818
    %v1143 = vpack.c.b16 %v823, %v819
    %v1144 = vpack.c.b16 %v824, %v820
    %v1145 = vpack.c.b16 %v829, %v825
    %v1146 = vpack.c.b16 %v830, %v826
    %v1147 = vpack.c.b16 %v831, %v827
    %v1148 = vpack.c.b16 %v832, %v828
    %v1149 = vpack.c.b16 %v837, %v833
    %v1150 = vpack.c.b16 %v838, %v834
    %v1151 = vpack.c.b16 %v839, %v835
    %v1152 = vpack.c.b16 %v840, %v836
    %v1153 = vpack.c.b16 %v845, %v841
    %v1154 = vpack.c.b16 %v846, %v842
    %v1155 = vpack.c.b16 %v847, %v843
    %v1156 = vpack.c.b16 %v848, %v844
    %v1157 = vpack.c.b16 %v853, %v849
    %v1158 = vpack.c.b16 %v854, %v850
    %v1159 = vpack.c.b16 %v855, %v851
    %v1160 = vpack.c.b16 %v856, %v852
    %v1161 = vpack.c.b16 %v861, %v857
    %v1162 = vpack.c.b16 %v862, %v858
    %v1163 = vpack.c.b16 %v863, %v859
    %v1164 = vpack.c.b16 %v864, %v860
    %v1165 = vpack.c.b16 %v869, %v865
    %v1166 = vpack.c.b16 %v870, %v866
    %v1167 = vpack.c.b16 %v871, %v867
    %v1168 = vpack.c.b16 %v872, %v868
    %v1169 = vpack.c.b16 %v877, %v873
    %v1170 = vpack.c.b16 %v878, %v874
    %v1171 = vpack.c.b16 %v879, %v875
    %v1172 = vpack.c.b16 %v880, %v876
    %v1173 = vpack.c.b16 %v885, %v881
    %v1174 = vpack.c.b16 %v886, %v882
    %v1175 = vpack.c.b16 %v887, %v883
    %v1176 = vpack.c.b16 %v888, %v884
    %v1177 = vpack.c.b16 %v893, %v889
    %v1178 = vpack.c.b16 %v894, %v890
    %v1179 = vpack.c.b16 %v895, %v891
    %v1180 = vpack.c.b16 %v896, %v892
    %v1181 = vpack.c.b16 %v901, %v897
    %v1182 = vpack.c.b16 %v902, %v898
    %v1183 = vpack.c.b16 %v903, %v899
    %v1184 = vpack.c.b16 %v904, %v900
    %v1185 = vpack.c.b16 %v909, %v905
    %v1186 = vpack.c.b16 %v910, %v906
    %v1187 = vpack.c.b16 %v911, %v907
    %v1188 = vpack.c.b16 %v912, %v908
    %v1189 = vpack.c.b16 %v917, %v913
    %v1190 = vpack.c.b16 %v918, %v914
    %v1191 = vpack.c.b16 %v919, %v915
    %v1192 = vpack.c.b16 %v920, %v916
    %v1193 = vpack.c.b16 %v925, %v921
    %v1194 = vpack.c.b16 %v926, %v922
    %v1195 = vpack.c.b16 %v927, %v923
    %v1196 = vpack.c.b16 %v928, %v924
    %v1197 = vpack.c.b16 %v933, %v929
    %v1198 = vpack.c.b16 %v934, %v930
    %v1199 = vpack.c.b16 %v935, %v931
    %v1200 = vpack.c.b16 %v936, %v932
    %v1201 = vpack.c.b16 %v941, %v937
    %v1202 = vpack.c.b16 %v942, %v938
    %v1203 = vpack.c.b16 %v943, %v939
    %v1204 = vpack.c.b16 %v944, %v940
    %v1205 = vpack.c.b16 %v949, %v945
    %v1206 = vpack.c.b16 %v950, %v946
    %v1207 = vpack.c.b16 %v951, %v947
    %v1208 = vpack.c.b16 %v952, %v948
    %v1209 = vpack.c.b16 %v957, %v953
    %v1210 = vpack.c.b16 %v958, %v954
    %v1211 = vpack.c.b16 %v959, %v955
    %v1212 = vpack.c.b16 %v960, %v956
    %v1213 = vpack.c.b16 %v965, %v961
    %v1214 = vpack.c.b16 %v966, %v962
    %v1215 = vpack.c.b16 %v967, %v963
    %v1216 = vpack.c.b16 %v968, %v964
    %v1217 = vpack.c.b16 %v973, %v969
    %v1218 = vpack.c.b16 %v974, %v970
    %v1219 = vpack.c.b16 %v975, %v971
    %v1220 = vpack.c.b16 %v976, %v972
    %v1221 = vpack.c.b16 %v981, %v977
    %v1222 = vpack.c.b16 %v982, %v978
    %v1223 = vpack.c.b16 %v983, %v979
    %v1224 = vpack.c.b16 %v984, %v980
    %v1225 = vpack.c.b16 %v989, %v985
    %v1226 = vpack.c.b16 %v990, %v986
    %v1227 = vpack.c.b16 %v991, %v987
    %v1228 = vpack.c.b16 %v992, %v988
    %v1229 = vpack.c.b16 %v997, %v993
    %v1230 = vpack.c.b16 %v998, %v994
    %v1231 = vpack.c.b16 %v999, %v995
    %v1232 = vpack.c.b16 %v1000, %v996
    %v1233 = vpack.c.b16 %v1005, %v1001
    %v1234 = vpack.c.b16 %v1006, %v1002
    %v1235 = vpack.c.b16 %v1007, %v1003
    %v1236 = vpack.c.b16 %v1008, %v1004
    %v1237 = vpack.c.b16 %v1013, %v1009
    %v1238 = vpack.c.b16 %v1014, %v1010
    %v1239 = vpack.c.b16 %v1015, %v1011
    %v1240 = vpack.c.b16 %v1016, %v1012
    %1465 = vmatprep.subr.bf16.mxu0 %v1046
    %1466 = vmatpush1.bf16.msra.mxu0 %v1045
    %1467 = vmatprep.subr.bf16.mxu0 %v1042
    %1468 = vmatpush1.bf16.msra.mxu0 %v1041
    %1469 = vmatprep.subr.bf16.mxu0 %v1038
    %1470 = vmatpush1.bf16.msra.mxu0 %v1037
    %1471 = vmatprep.subr.bf16.mxu0 %v1034
    %1472 = vmatpush1.bf16.msra.mxu0 %v1033
    %1473 = vmatprep.subr.bf16.mxu0 %v1030
    %1474 = vmatpush1.bf16.msra.mxu0 %v1029
    %1475 = vmatprep.subr.bf16.mxu0 %v1026
    %1476 = vmatpush1.bf16.msra.mxu0 %v1025
    %1477 = vmatprep.subr.bf16.mxu0 %v1022
    %1478 = vmatpush1.bf16.msra.mxu0 %v1021
    %1479 = vmatprep.subr.bf16.mxu0 %v1018
    %1480 = vmatpush1.bf16.msra.mxu0 %v1017
    %1481 = vmatprep.subr.bf16.mxu0 %v1078
    %1482 = vmatpush2.bf16.msra.mxu0 %v1077
    %1483 = vmatprep.subr.bf16.mxu0 %v1074
    %1484 = vmatpush2.bf16.msra.mxu0 %v1073
    %1485 = vmatprep.subr.bf16.mxu0 %v1070
    %1486 = vmatpush2.bf16.msra.mxu0 %v1069
    %1487 = vmatprep.subr.bf16.mxu0 %v1066
    %1488 = vmatpush2.bf16.msra.mxu0 %v1065
    %1489 = vmatprep.subr.bf16.mxu0 %v1062
    %1490 = vmatpush2.bf16.msra.mxu0 %v1061
    %1491 = vmatprep.subr.bf16.mxu0 %v1058
    %1492 = vmatpush2.bf16.msra.mxu0 %v1057
    %1493 = vmatprep.subr.bf16.mxu0 %v1054
    %1494 = vmatpush2.bf16.msra.mxu0 %v1053
    %1495 = vmatprep.subr.bf16.mxu0 %v1050
    %1496 = vmatpush2.bf16.msra.mxu0 %v1049
    %1497 = vmatprep.mubr.bf16.mxu0 %v332
    %1498 = vmatmul.mubr.bf16.gmra.mxu0 %v331
    %v1499 = vpop.f32.mrf.mxu0
    %v1500 = vadd.f32 %v292, %v1499
    %v1501 = vpop.f32.mrf.mxu0
    %v1502 = vadd.f32 %v296, %v1501
    %v1503 = vpop.f32.mrf.mxu0
    %v1504 = vadd.f32 %v292, %v1503
    %v1505 = vpop.f32.mrf.mxu0
    %v1506 = vadd.f32 %v296, %v1505
    %1507 = vdwg.mxu0
    %1508 = vmatprep.subr.bf16.mxu0 %v1110
    %1509 = vmatpush1.bf16.msra.mxu0 %v1109
    %1510 = vmatprep.subr.bf16.mxu0 %v1106
    %1511 = vmatpush1.bf16.msra.mxu0 %v1105
    %1512 = vmatprep.subr.bf16.mxu0 %v1102
    %1513 = vmatpush1.bf16.msra.mxu0 %v1101
    %1514 = vmatprep.subr.bf16.mxu0 %v1098
    %1515 = vmatpush1.bf16.msra.mxu0 %v1097
    %1516 = vmatprep.subr.bf16.mxu0 %v1094
    %1517 = vmatpush1.bf16.msra.mxu0 %v1093
    %1518 = vmatprep.subr.bf16.mxu0 %v1090
    %1519 = vmatpush1.bf16.msra.mxu0 %v1089
    %1520 = vmatprep.subr.bf16.mxu0 %v1086
    %1521 = vmatpush1.bf16.msra.mxu0 %v1085
    %1522 = vmatprep.subr.bf16.mxu0 %v1082
    %1523 = vmatpush1.bf16.msra.mxu0 %v1081
    %1524 = vmatprep.subr.bf16.mxu0 %v1142
    %1525 = vmatpush2.bf16.msra.mxu0 %v1141
    %1526 = vmatprep.subr.bf16.mxu0 %v1138
    %1527 = vmatpush2.bf16.msra.mxu0 %v1137
    %1528 = vmatprep.subr.bf16.mxu0 %v1134
    %1529 = vmatpush2.bf16.msra.mxu0 %v1133
    %1530 = vmatprep.subr.bf16.mxu0 %v1130
    %1531 = vmatpush2.bf16.msra.mxu0 %v1129
    %1532 = vmatprep.subr.bf16.mxu0 %v1126
    %1533 = vmatpush2.bf16.msra.mxu0 %v1125
    %1534 = vmatprep.subr.bf16.mxu0 %v1122
    %1535 = vmatpush2.bf16.msra.mxu0 %v1121
    %1536 = vmatprep.subr.bf16.mxu0 %v1118
    %1537 = vmatpush2.bf16.msra.mxu0 %v1117
    %1538 = vmatprep.subr.bf16.mxu0 %v1114
    %1539 = vmatpush2.bf16.msra.mxu0 %v1113
    %1540 = vmatprep.mubr.bf16.mxu0 %v334
    %1541 = vmatmul.mubr.bf16.gmra.mxu0 %v333
    %v1542 = vpop.f32.mrf.mxu0
    %v1543 = vadd.f32 %v1500, %v1542
    %v1544 = vpop.f32.mrf.mxu0
    %v1545 = vadd.f32 %v1502, %v1544
    %v1546 = vpop.f32.mrf.mxu0
    %v1547 = vadd.f32 %v1504, %v1546
    %v1548 = vpop.f32.mrf.mxu0
    %v1549 = vadd.f32 %v1506, %v1548
    %1550 = vdwg.mxu0
    %1551 = vmatprep.subr.bf16.mxu0 %v1174
    %1552 = vmatpush1.bf16.msra.mxu0 %v1173
    %1553 = vmatprep.subr.bf16.mxu0 %v1170
    %1554 = vmatpush1.bf16.msra.mxu0 %v1169
    %1555 = vmatprep.subr.bf16.mxu0 %v1166
    %1556 = vmatpush1.bf16.msra.mxu0 %v1165
    %1557 = vmatprep.subr.bf16.mxu0 %v1162
    %1558 = vmatpush1.bf16.msra.mxu0 %v1161
    %1559 = vmatprep.subr.bf16.mxu0 %v1158
    %1560 = vmatpush1.bf16.msra.mxu0 %v1157
    %1561 = vmatprep.subr.bf16.mxu0 %v1154
    %1562 = vmatpush1.bf16.msra.mxu0 %v1153
    %1563 = vmatprep.subr.bf16.mxu0 %v1150
    %1564 = vmatpush1.bf16.msra.mxu0 %v1149
    %1565 = vmatprep.subr.bf16.mxu0 %v1146
    %1566 = vmatpush1.bf16.msra.mxu0 %v1145
    %1567 = vmatprep.subr.bf16.mxu0 %v1206
    %1568 = vmatpush2.bf16.msra.mxu0 %v1205
    %1569 = vmatprep.subr.bf16.mxu0 %v1202
    %1570 = vmatpush2.bf16.msra.mxu0 %v1201
    %1571 = vmatprep.subr.bf16.mxu0 %v1198
    %1572 = vmatpush2.bf16.msra.mxu0 %v1197
    %1573 = vmatprep.subr.bf16.mxu0 %v1194
    %1574 = vmatpush2.bf16.msra.mxu0 %v1193
    %1575 = vmatprep.subr.bf16.mxu0 %v1190
    %1576 = vmatpush2.bf16.msra.mxu0 %v1189
    %1577 = vmatprep.subr.bf16.mxu0 %v1186
    %1578 = vmatpush2.bf16.msra.mxu0 %v1185
    %1579 = vmatprep.subr.bf16.mxu0 %v1182
    %1580 = vmatpush2.bf16.msra.mxu0 %v1181
    %1581 = vmatprep.subr.bf16.mxu0 %v1178
    %1582 = vmatpush2.bf16.msra.mxu0 %v1177
    %1583 = vmatprep.mubr.bf16.mxu0 %v336
    %1584 = vmatmul.mubr.bf16.gmra.mxu0 %v335
    %v1585 = vpop.f32.mrf.mxu0
    %v1586 = vadd.f32 %v1543, %v1585
    %v1587 = vpop.f32.mrf.mxu0
    %v1588 = vadd.f32 %v1545, %v1587
    %v1589 = vpop.f32.mrf.mxu0
    %v1590 = vadd.f32 %v1547, %v1589
    %v1591 = vpop.f32.mrf.mxu0
    %v1592 = vadd.f32 %v1549, %v1591
    %1593 = vdwg.mxu0
    %1594 = vmatprep.subr.bf16.mxu0 %v1238
    %1595 = vmatpush1.bf16.msra.mxu0 %v1237
    %1596 = vmatprep.subr.bf16.mxu0 %v1234
    %1597 = vmatpush1.bf16.msra.mxu0 %v1233
    %1598 = vmatprep.subr.bf16.mxu0 %v1230
    %1599 = vmatpush1.bf16.msra.mxu0 %v1229
    %1600 = vmatprep.subr.bf16.mxu0 %v1226
    %1601 = vmatpush1.bf16.msra.mxu0 %v1225
    %1602 = vmatprep.subr.bf16.mxu0 %v1222
    %1603 = vmatpush1.bf16.msra.mxu0 %v1221
    %1604 = vmatprep.subr.bf16.mxu0 %v1218
    %1605 = vmatpush1.bf16.msra.mxu0 %v1217
    %1606 = vmatprep.subr.bf16.mxu0 %v1214
    %1607 = vmatpush1.bf16.msra.mxu0 %v1213
    %1608 = vmatprep.subr.bf16.mxu0 %v1210
    %1609 = vmatpush1.bf16.msra.mxu0 %v1209
    %1610 = vmatprep.subr.bf16.mxu0 0
    %1611 = vmatpush2.bf16.msra.mxu0 0
    %1612 = vmatprep.subr.bf16.mxu0 0
    %1613 = vmatpush2.bf16.msra.mxu0 0
    %1614 = vmatprep.subr.bf16.mxu0 0
    %1615 = vmatpush2.bf16.msra.mxu0 0
    %1616 = vmatprep.subr.bf16.mxu0 0
    %1617 = vmatpush2.bf16.msra.mxu0 0
    %1618 = vmatprep.subr.bf16.mxu0 0
    %1619 = vmatpush2.bf16.msra.mxu0 0
    %1620 = vmatprep.subr.bf16.mxu0 0
    %1621 = vmatpush2.bf16.msra.mxu0 0
    %1622 = vmatprep.subr.bf16.mxu0 0
    %1623 = vmatpush2.bf16.msra.mxu0 0
    %1624 = vmatprep.subr.bf16.mxu0 0
    %1625 = vmatpush2.bf16.msra.mxu0 0
    %1626 = vmatprep.mubr.bf16.mxu0 0
    %1627 = vmatmul.mubr.bf16.gmra.mxu0 %v337
    %v1628 = vpop.f32.mrf.mxu0
    %v1629 = vadd.f32 %v1586, %v1628
    %v1630 = vpop.f32.mrf.mxu0
    %v1631 = vadd.f32 %v1588, %v1630
    %v1632 = vpop.f32.mrf.mxu0
    %v1633 = vadd.f32 %v1590, %v1632
    %v1634 = vpop.f32.mrf.mxu0
    %v1635 = vadd.f32 %v1592, %v1634
    %1636 = vdwg.mxu0
    %1637 = vmatprep.subr.bf16.mxu0 %v1048
    %1638 = vmatpush1.bf16.msra.mxu0 %v1047
    %1639 = vmatprep.subr.bf16.mxu0 %v1044
    %1640 = vmatpush1.bf16.msra.mxu0 %v1043
    %1641 = vmatprep.subr.bf16.mxu0 %v1040
    %1642 = vmatpush1.bf16.msra.mxu0 %v1039
    %1643 = vmatprep.subr.bf16.mxu0 %v1036
    %1644 = vmatpush1.bf16.msra.mxu0 %v1035
    %1645 = vmatprep.subr.bf16.mxu0 %v1032
    %1646 = vmatpush1.bf16.msra.mxu0 %v1031
    %1647 = vmatprep.subr.bf16.mxu0 %v1028
    %1648 = vmatpush1.bf16.msra.mxu0 %v1027
    %1649 = vmatprep.subr.bf16.mxu0 %v1024
    %1650 = vmatpush1.bf16.msra.mxu0 %v1023
    %1651 = vmatprep.subr.bf16.mxu0 %v1020
    %1652 = vmatpush1.bf16.msra.mxu0 %v1019
    %1653 = vmatprep.subr.bf16.mxu0 %v1080
    %1654 = vmatpush2.bf16.msra.mxu0 %v1079
    %1655 = vmatprep.subr.bf16.mxu0 %v1076
    %1656 = vmatpush2.bf16.msra.mxu0 %v1075
    %1657 = vmatprep.subr.bf16.mxu0 %v1072
    %1658 = vmatpush2.bf16.msra.mxu0 %v1071
    %1659 = vmatprep.subr.bf16.mxu0 %v1068
    %1660 = vmatpush2.bf16.msra.mxu0 %v1067
    %1661 = vmatprep.subr.bf16.mxu0 %v1064
    %1662 = vmatpush2.bf16.msra.mxu0 %v1063
    %1663 = vmatprep.subr.bf16.mxu0 %v1060
    %1664 = vmatpush2.bf16.msra.mxu0 %v1059
    %1665 = vmatprep.subr.bf16.mxu0 %v1056
    %1666 = vmatpush2.bf16.msra.mxu0 %v1055
    %1667 = vmatprep.subr.bf16.mxu0 %v1052
    %1668 = vmatpush2.bf16.msra.mxu0 %v1051
    %1669 = vmatprep.mubr.bf16.mxu0 %v332
    %1670 = vmatmul.mubr.bf16.gmra.mxu0 %v331
    %v1671 = vpop.f32.mrf.mxu0
    %v1672 = vadd.f32 %v300, %v1671
    %v1673 = vpop.f32.mrf.mxu0
    %v1674 = vadd.f32 %v304, %v1673
    %v1675 = vpop.f32.mrf.mxu0
    %v1676 = vadd.f32 %v300, %v1675
    %v1677 = vpop.f32.mrf.mxu0
    %v1678 = vadd.f32 %v304, %v1677
    %1679 = vdwg.mxu0
    %1680 = vmatprep.subr.bf16.mxu0 %v1112
    %1681 = vmatpush1.bf16.msra.mxu0 %v1111
    %1682 = vmatprep.subr.bf16.mxu0 %v1108
    %1683 = vmatpush1.bf16.msra.mxu0 %v1107
    %1684 = vmatprep.subr.bf16.mxu0 %v1104
    %1685 = vmatpush1.bf16.msra.mxu0 %v1103
    %1686 = vmatprep.subr.bf16.mxu0 %v1100
    %1687 = vmatpush1.bf16.msra.mxu0 %v1099
    %1688 = vmatprep.subr.bf16.mxu0 %v1096
    %1689 = vmatpush1.bf16.msra.mxu0 %v1095
    %1690 = vmatprep.subr.bf16.mxu0 %v1092
    %1691 = vmatpush1.bf16.msra.mxu0 %v1091
    %1692 = vmatprep.subr.bf16.mxu0 %v1088
    %1693 = vmatpush1.bf16.msra.mxu0 %v1087
    %1694 = vmatprep.subr.bf16.mxu0 %v1084
    %1695 = vmatpush1.bf16.msra.mxu0 %v1083
    %1696 = vmatprep.subr.bf16.mxu0 %v1144
    %1697 = vmatpush2.bf16.msra.mxu0 %v1143
    %1698 = vmatprep.subr.bf16.mxu0 %v1140
    %1699 = vmatpush2.bf16.msra.mxu0 %v1139
    %1700 = vmatprep.subr.bf16.mxu0 %v1136
    %1701 = vmatpush2.bf16.msra.mxu0 %v1135
    %1702 = vmatprep.subr.bf16.mxu0 %v1132
    %1703 = vmatpush2.bf16.msra.mxu0 %v1131
    %1704 = vmatprep.subr.bf16.mxu0 %v1128
    %1705 = vmatpush2.bf16.msra.mxu0 %v1127
    %1706 = vmatprep.subr.bf16.mxu0 %v1124
    %1707 = vmatpush2.bf16.msra.mxu0 %v1123
    %1708 = vmatprep.subr.bf16.mxu0 %v1120
    %1709 = vmatpush2.bf16.msra.mxu0 %v1119
    %1710 = vmatprep.subr.bf16.mxu0 %v1116
    %1711 = vmatpush2.bf16.msra.mxu0 %v1115
    %1712 = vmatprep.mubr.bf16.mxu0 %v334
    %1713 = vmatmul.mubr.bf16.gmra.mxu0 %v333
    %v1714 = vpop.f32.mrf.mxu0
    %v1715 = vadd.f32 %v1672, %v1714
    %v1716 = vpop.f32.mrf.mxu0
    %v1717 = vadd.f32 %v1674, %v1716
    %v1718 = vpop.f32.mrf.mxu0
    %v1719 = vadd.f32 %v1676, %v1718
    %v1720 = vpop.f32.mrf.mxu0
    %v1721 = vadd.f32 %v1678, %v1720
    %1722 = vdwg.mxu0
    %1723 = vmatprep.subr.bf16.mxu0 %v1176
    %1724 = vmatpush1.bf16.msra.mxu0 %v1175
    %1725 = vmatprep.subr.bf16.mxu0 %v1172
    %1726 = vmatpush1.bf16.msra.mxu0 %v1171
    %1727 = vmatprep.subr.bf16.mxu0 %v1168
    %1728 = vmatpush1.bf16.msra.mxu0 %v1167
    %1729 = vmatprep.subr.bf16.mxu0 %v1164
    %1730 = vmatpush1.bf16.msra.mxu0 %v1163
    %1731 = vmatprep.subr.bf16.mxu0 %v1160
    %1732 = vmatpush1.bf16.msra.mxu0 %v1159
    %1733 = vmatprep.subr.bf16.mxu0 %v1156
    %1734 = vmatpush1.bf16.msra.mxu0 %v1155
    %1735 = vmatprep.subr.bf16.mxu0 %v1152
    %1736 = vmatpush1.bf16.msra.mxu0 %v1151
    %1737 = vmatprep.subr.bf16.mxu0 %v1148
    %1738 = vmatpush1.bf16.msra.mxu0 %v1147
    %1739 = vmatprep.subr.bf16.mxu0 %v1208
    %1740 = vmatpush2.bf16.msra.mxu0 %v1207
    %1741 = vmatprep.subr.bf16.mxu0 %v1204
    %1742 = vmatpush2.bf16.msra.mxu0 %v1203
    %1743 = vmatprep.subr.bf16.mxu0 %v1200
    %1744 = vmatpush2.bf16.msra.mxu0 %v1199
    %1745 = vmatprep.subr.bf16.mxu0 %v1196
    %1746 = vmatpush2.bf16.msra.mxu0 %v1195
    %1747 = vmatprep.subr.bf16.mxu0 %v1192
    %1748 = vmatpush2.bf16.msra.mxu0 %v1191
    %1749 = vmatprep.subr.bf16.mxu0 %v1188
    %1750 = vmatpush2.bf16.msra.mxu0 %v1187
    %1751 = vmatprep.subr.bf16.mxu0 %v1184
    %1752 = vmatpush2.bf16.msra.mxu0 %v1183
    %1753 = vmatprep.subr.bf16.mxu0 %v1180
    %1754 = vmatpush2.bf16.msra.mxu0 %v1179
    %1755 = vmatprep.mubr.bf16.mxu0 %v336
    %1756 = vmatmul.mubr.bf16.gmra.mxu0 %v335
    %v1757 = vpop.f32.mrf.mxu0
    %v1758 = vadd.f32 %v1715, %v1757
    %v1759 = vpop.f32.mrf.mxu0
    %v1760 = vadd.f32 %v1717, %v1759
    %v1761 = vpop.f32.mrf.mxu0
    %v1762 = vadd.f32 %v1719, %v1761
    %v1763 = vpop.f32.mrf.mxu0
    %v1764 = vadd.f32 %v1721, %v1763
    %1765 = vdwg.mxu0
    %1766 = vmatprep.subr.bf16.mxu0 %v1240
    %1767 = vmatpush1.bf16.msra.mxu0 %v1239
    %1768 = vmatprep.subr.bf16.mxu0 %v1236
    %1769 = vmatpush1.bf16.msra.mxu0 %v1235
    %1770 = vmatprep.subr.bf16.mxu0 %v1232
    %1771 = vmatpush1.bf16.msra.mxu0 %v1231
    %1772 = vmatprep.subr.bf16.mxu0 %v1228
    %1773 = vmatpush1.bf16.msra.mxu0 %v1227
    %1774 = vmatprep.subr.bf16.mxu0 %v1224
    %1775 = vmatpush1.bf16.msra.mxu0 %v1223
    %1776 = vmatprep.subr.bf16.mxu0 %v1220
    %1777 = vmatpush1.bf16.msra.mxu0 %v1219
    %1778 = vmatprep.subr.bf16.mxu0 %v1216
    %1779 = vmatpush1.bf16.msra.mxu0 %v1215
    %1780 = vmatprep.subr.bf16.mxu0 %v1212
    %1781 = vmatpush1.bf16.msra.mxu0 %v1211
    %1782 = vmatprep.subr.bf16.mxu0 0
    %1783 = vmatpush2.bf16.msra.mxu0 0
    %1784 = vmatprep.subr.bf16.mxu0 0
    %1785 = vmatpush2.bf16.msra.mxu0 0
    %1786 = vmatprep.subr.bf16.mxu0 0
    %1787 = vmatpush2.bf16.msra.mxu0 0
    %1788 = vmatprep.subr.bf16.mxu0 0
    %1789 = vmatpush2.bf16.msra.mxu0 0
    %1790 = vmatprep.subr.bf16.mxu0 0
    %1791 = vmatpush2.bf16.msra.mxu0 0
    %1792 = vmatprep.subr.bf16.mxu0 0
    %1793 = vmatpush2.bf16.msra.mxu0 0
    %1794 = vmatprep.subr.bf16.mxu0 0
    %1795 = vmatpush2.bf16.msra.mxu0 0
    %1796 = vmatprep.subr.bf16.mxu0 0
    %1797 = vmatpush2.bf16.msra.mxu0 0
    %1798 = vmatprep.mubr.bf16.mxu0 0
    %1799 = vmatmul.mubr.bf16.gmra.mxu0 %v337
    %v1800 = vpop.f32.mrf.mxu0
    %v1801 = vadd.f32 %v1758, %v1800
    %v1802 = vpop.f32.mrf.mxu0
    %v1803 = vadd.f32 %v1760, %v1802
    %v1804 = vpop.f32.mrf.mxu0
    %v1805 = vadd.f32 %v1762, %v1804
    %v1806 = vpop.f32.mrf.mxu0
    %v1807 = vadd.f32 %v1764, %v1806
    %1808 = vdwg.mxu0
    %v1809 = vmax.f32 %v1629, 0.0
    %v1810 = vmax.f32 %v1631, 0.0
    %v1811 = vmax.f32 %v1801, 0.0
    %v1812 = vmax.f32 %v1803, 0.0
    %v1813 = vmax.f32 %v1633, 0.0
    %v1814 = vmax.f32 %v1635, 0.0
    %v1815 = vmax.f32 %v1805, 0.0
    %v1816 = vmax.f32 %v1807, 0.0
    %v1817 = vpack.c.bf16 %v1813, %v1809
    %v1818 = vpack.c.bf16 %v1814, %v1810
    %v1819 = vpack.c.bf16 %v1815, %v1811
    %v1820 = vpack.c.bf16 %v1816, %v1812
    %v1821 = vld [vmem:[#allocation4] sm:$0xff]
    %v1822 = vld [vmem:[#allocation4 + $0x8] sm:$0xff]
    %v1823 = vld [vmem:[#allocation4 + $0x10] sm:$0xff]
    %v1824 = vld [vmem:[#allocation4 + $0x18] sm:$0xff]
    %v1825 = vld [vmem:[#allocation4 + $0x20] sm:$0xff]
    %v1826 = vld [vmem:[#allocation4 + $0x28] sm:$0xff]
    %v1827 = vld [vmem:[#allocation4 + $0x30] sm:$0xff]
    %v1828 = vld [vmem:[#allocation4 + $0x38] sm:$0xff]
    %v1829 = vld [vmem:[#allocation4 + $0x40] sm:$0xff]
    %v1830 = vld [vmem:[#allocation4 + $0x48] sm:$0xff]
    %v1831 = vld [vmem:[#allocation4 + $0x50] sm:$0xff]
    %v1832 = vld [vmem:[#allocation4 + $0x58] sm:$0xff]
    %v1833 = vld [vmem:[#allocation4 + $0x60] sm:$0xff]
    %v1834 = vld [vmem:[#allocation4 + $0x68] sm:$0xff]
    %v1835 = vld [vmem:[#allocation4 + $0x70] sm:$0xff]
    %v1836 = vld [vmem:[#allocation4 + $0x78] sm:$0xff]
    %v1837 = vld [vmem:[#allocation4 + $0x80] sm:$0xff]
    %v1838 = vld [vmem:[#allocation4 + $0x88] sm:$0xff]
    %v1839 = vld [vmem:[#allocation4 + $0x90] sm:$0xff]
    %v1840 = vld [vmem:[#allocation4 + $0x98] sm:$0xff]
    %v1841 = vld [vmem:[#allocation4 + $0xa0] sm:$0xff]
    %v1842 = vld [vmem:[#allocation4 + $0xa8] sm:$0xff]
    %v1843 = vld [vmem:[#allocation4 + $0xb0] sm:$0xff]
    %v1844 = vld [vmem:[#allocation4 + $0xb8] sm:$0xff]
    %v1845 = vld [vmem:[#allocation4 + $0xc0] sm:$0xff]
    %v1846 = vld [vmem:[#allocation4 + $0xc8] sm:$0xff]
    %v1847 = vld [vmem:[#allocation4 + $0xd0] sm:$0xff]
    %v1848 = vld [vmem:[#allocation4 + $0xd8] sm:$0xff]
    %v1849 = vld [vmem:[#allocation4 + $0xe0] sm:$0xff]
    %v1850 = vld [vmem:[#allocation4 + $0xe8] sm:$0xff]
    %v1851 = vld [vmem:[#allocation4 + $0xf0] sm:$0xff]
    %v1852 = vld [vmem:[#allocation4 + $0xf8] sm:$0xff]
    %v1853 = vld [vmem:[#allocation4 + $0x100] sm:$0xff]
    %v1854 = vld [vmem:[#allocation4 + $0x108] sm:$0xff]
    %v1855 = vld [vmem:[#allocation4 + $0x110] sm:$0xff]
    %v1856 = vld [vmem:[#allocation4 + $0x118] sm:$0xff]
    %v1857 = vld [vmem:[#allocation4 + $0x120] sm:$0xff]
    %v1858 = vld [vmem:[#allocation4 + $0x128] sm:$0xff]
    %v1859 = vld [vmem:[#allocation4 + $0x130] sm:$0xff]
    %v1860 = vld [vmem:[#allocation4 + $0x138] sm:$0xff]
    %v1861 = vld [vmem:[#allocation4 + $0x140] sm:$0xff]
    %v1862 = vld [vmem:[#allocation4 + $0x148] sm:$0xff]
    %v1863 = vld [vmem:[#allocation4 + $0x150] sm:$0xff]
    %v1864 = vld [vmem:[#allocation4 + $0x158] sm:$0xff]
    %v1865 = vld [vmem:[#allocation4 + $0x160] sm:$0xff]
    %v1866 = vld [vmem:[#allocation4 + $0x168] sm:$0xff]
    %v1867 = vld [vmem:[#allocation4 + $0x170] sm:$0xff]
    %v1868 = vld [vmem:[#allocation4 + $0x178] sm:$0xff]
    %v1869 = vld [vmem:[#allocation4 + $0x180] sm:$0xff]
    %v1870 = vld [vmem:[#allocation4 + $0x188] sm:$0xff]
    %v1871 = vld [vmem:[#allocation4 + $0x190] sm:$0xff]
    %v1872 = vld [vmem:[#allocation4 + $0x198] sm:$0xff]
    %v1873 = vld [vmem:[#allocation4 + $0x1a0] sm:$0xff]
    %v1874 = vld [vmem:[#allocation4 + $0x1a8] sm:$0xff]
    %v1875 = vld [vmem:[#allocation4 + $0x1b0] sm:$0xff]
    %v1876 = vld [vmem:[#allocation4 + $0x1b8] sm:$0xff]
    %v1877 = vld [vmem:[#allocation4 + $0x1c0] sm:$0xff]
    %v1878 = vld [vmem:[#allocation4 + $0x1c8] sm:$0xff]
    %v1879 = vld [vmem:[#allocation4 + $0x1d0] sm:$0xff]
    %v1880 = vld [vmem:[#allocation4 + $0x1d8] sm:$0xff]
    %v1881 = vld [vmem:[#allocation4 + $0x1e0] sm:$0xff]
    %v1882 = vld [vmem:[#allocation4 + $0x1e8] sm:$0xff]
    %v1883 = vld [vmem:[#allocation4 + $0x1f0] sm:$0xff]
    %v1884 = vld [vmem:[#allocation4 + $0x1f8] sm:$0xff]
    %v1885 = vld [vmem:[%s4] sm:$0x3]
    %v1887 = vlaneseq
    %v1888 = vshrl.u32 %v1887, 7
    %v1889 = vsub.s32 0, %v1888
    %v1890 = vrot.slane %v1885, %v1889
    %v1891 = vlaneseq
    %v1892 = vshrl.u32 %v1891, 7
    %v1893 = vsub.s32 1, %v1892
    %v1894 = vrot.slane %v1885, %v1893
    %v1961 = vunpack.c.l.b16 %v1821
    %v1962 = vunpack.c.h.b16 %v1821
    %v1963 = vunpack.c.l.b16 %v1822
    %v1964 = vunpack.c.h.b16 %v1822
    %v1965 = vunpack.c.l.b16 %v1823
    %v1966 = vunpack.c.h.b16 %v1823
    %v1967 = vunpack.c.l.b16 %v1824
    %v1968 = vunpack.c.h.b16 %v1824
    %v1969 = vunpack.c.l.b16 %v1825
    %v1970 = vunpack.c.h.b16 %v1825
    %v1971 = vunpack.c.l.b16 %v1826
    %v1972 = vunpack.c.h.b16 %v1826
    %v1973 = vunpack.c.l.b16 %v1827
    %v1974 = vunpack.c.h.b16 %v1827
    %v1975 = vunpack.c.l.b16 %v1828
    %v1976 = vunpack.c.h.b16 %v1828
    %v1977 = vunpack.c.l.b16 %v1829
    %v1978 = vunpack.c.h.b16 %v1829
    %v1979 = vunpack.c.l.b16 %v1830
    %v1980 = vunpack.c.h.b16 %v1830
    %v1981 = vunpack.c.l.b16 %v1831
    %v1982 = vunpack.c.h.b16 %v1831
    %v1983 = vunpack.c.l.b16 %v1832
    %v1984 = vunpack.c.h.b16 %v1832
    %v1985 = vunpack.c.l.b16 %v1833
    %v1986 = vunpack.c.h.b16 %v1833
    %v1987 = vunpack.c.l.b16 %v1834
    %v1988 = vunpack.c.h.b16 %v1834
    %v1989 = vunpack.c.l.b16 %v1835
    %v1990 = vunpack.c.h.b16 %v1835
    %v1991 = vunpack.c.l.b16 %v1836
    %v1992 = vunpack.c.h.b16 %v1836
    %v1993 = vunpack.c.l.b16 %v1837
    %v1994 = vunpack.c.h.b16 %v1837
    %v1995 = vunpack.c.l.b16 %v1838
    %v1996 = vunpack.c.h.b16 %v1838
    %v1997 = vunpack.c.l.b16 %v1839
    %v1998 = vunpack.c.h.b16 %v1839
    %v1999 = vunpack.c.l.b16 %v1840
    %v2000 = vunpack.c.h.b16 %v1840
    %v2001 = vunpack.c.l.b16 %v1841
    %v2002 = vunpack.c.h.b16 %v1841
    %v2003 = vunpack.c.l.b16 %v1842
    %v2004 = vunpack.c.h.b16 %v1842
    %v2005 = vunpack.c.l.b16 %v1843
    %v2006 = vunpack.c.h.b16 %v1843
    %v2007 = vunpack.c.l.b16 %v1844
    %v2008 = vunpack.c.h.b16 %v1844
    %v2009 = vunpack.c.l.b16 %v1845
    %v2010 = vunpack.c.h.b16 %v1845
    %v2011 = vunpack.c.l.b16 %v1846
    %v2012 = vunpack.c.h.b16 %v1846
    %v2013 = vunpack.c.l.b16 %v1847
    %v2014 = vunpack.c.h.b16 %v1847
    %v2015 = vunpack.c.l.b16 %v1848
    %v2016 = vunpack.c.h.b16 %v1848
    %v2017 = vunpack.c.l.b16 %v1849
    %v2018 = vunpack.c.h.b16 %v1849
    %v2019 = vunpack.c.l.b16 %v1850
    %v2020 = vunpack.c.h.b16 %v1850
    %v2021 = vunpack.c.l.b16 %v1851
    %v2022 = vunpack.c.h.b16 %v1851
    %v2023 = vunpack.c.l.b16 %v1852
    %v2024 = vunpack.c.h.b16 %v1852
    %v2025 = vunpack.c.l.b16 %v1853
    %v2026 = vunpack.c.h.b16 %v1853
    %v2027 = vunpack.c.l.b16 %v1854
    %v2028 = vunpack.c.h.b16 %v1854
    %v2029 = vunpack.c.l.b16 %v1855
    %v2030 = vunpack.c.h.b16 %v1855
    %v2031 = vunpack.c.l.b16 %v1856
    %v2032 = vunpack.c.h.b16 %v1856
    %v2033 = vunpack.c.l.b16 %v1857
    %v2034 = vunpack.c.h.b16 %v1857
    %v2035 = vunpack.c.l.b16 %v1858
    %v2036 = vunpack.c.h.b16 %v1858
    %v2037 = vunpack.c.l.b16 %v1859
    %v2038 = vunpack.c.h.b16 %v1859
    %v2039 = vunpack.c.l.b16 %v1860
    %v2040 = vunpack.c.h.b16 %v1860
    %v2041 = vunpack.c.l.b16 %v1861
    %v2042 = vunpack.c.h.b16 %v1861
    %v2043 = vunpack.c.l.b16 %v1862
    %v2044 = vunpack.c.h.b16 %v1862
    %v2045 = vunpack.c.l.b16 %v1863
    %v2046 = vunpack.c.h.b16 %v1863
    %v2047 = vunpack.c.l.b16 %v1864
    %v2048 = vunpack.c.h.b16 %v1864
    %v2049 = vunpack.c.l.b16 %v1865
    %v2050 = vunpack.c.h.b16 %v1865
    %v2051 = vunpack.c.l.b16 %v1866
    %v2052 = vunpack.c.h.b16 %v1866
    %v2053 = vunpack.c.l.b16 %v1867
    %v2054 = vunpack.c.h.b16 %v1867
    %v2055 = vunpack.c.l.b16 %v1868
    %v2056 = vunpack.c.h.b16 %v1868
    %v2057 = vunpack.c.l.b16 %v1869
    %v2058 = vunpack.c.h.b16 %v1869
    %v2059 = vunpack.c.l.b16 %v1870
    %v2060 = vunpack.c.h.b16 %v1870
    %v2061 = vunpack.c.l.b16 %v1871
    %v2062 = vunpack.c.h.b16 %v1871
    %v2063 = vunpack.c.l.b16 %v1872
    %v2064 = vunpack.c.h.b16 %v1872
    %v2065 = vunpack.c.l.b16 %v1873
    %v2066 = vunpack.c.h.b16 %v1873
    %v2067 = vunpack.c.l.b16 %v1874
    %v2068 = vunpack.c.h.b16 %v1874
    %v2069 = vunpack.c.l.b16 %v1875
    %v2070 = vunpack.c.h.b16 %v1875
    %v2071 = vunpack.c.l.b16 %v1876
    %v2072 = vunpack.c.h.b16 %v1876
    %v2073 = vunpack.c.l.b16 %v1877
    %v2074 = vunpack.c.h.b16 %v1877
    %v2075 = vunpack.c.l.b16 %v1878
    %v2076 = vunpack.c.h.b16 %v1878
    %v2077 = vunpack.c.l.b16 %v1879
    %v2078 = vunpack.c.h.b16 %v1879
    %v2079 = vunpack.c.l.b16 %v1880
    %v2080 = vunpack.c.h.b16 %v1880
    %v2081 = vunpack.c.l.b16 %v1881
    %v2082 = vunpack.c.h.b16 %v1881
    %v2083 = vunpack.c.l.b16 %v1882
    %v2084 = vunpack.c.h.b16 %v1882
    %v2085 = vunpack.c.l.b16 %v1883
    %v2086 = vunpack.c.h.b16 %v1883
    %v2087 = vunpack.c.l.b16 %v1884
    %v2088 = vunpack.c.h.b16 %v1884
    %v2089 = vpack.c.b16 %v1963, %v1961
    %v2090 = vpack.c.b16 %v1964, %v1962
    %v2091 = vpack.c.b16 %v1967, %v1965
    %v2092 = vpack.c.b16 %v1968, %v1966
    %v2093 = vpack.c.b16 %v1971, %v1969
    %v2094 = vpack.c.b16 %v1972, %v1970
    %v2095 = vpack.c.b16 %v1975, %v1973
    %v2096 = vpack.c.b16 %v1976, %v1974
    %v2097 = vpack.c.b16 %v1979, %v1977
    %v2098 = vpack.c.b16 %v1980, %v1978
    %v2099 = vpack.c.b16 %v1983, %v1981
    %v2100 = vpack.c.b16 %v1984, %v1982
    %v2101 = vpack.c.b16 %v1987, %v1985
    %v2102 = vpack.c.b16 %v1988, %v1986
    %v2103 = vpack.c.b16 %v1991, %v1989
    %v2104 = vpack.c.b16 %v1992, %v1990
    %v2105 = vpack.c.b16 %v1995, %v1993
    %v2106 = vpack.c.b16 %v1996, %v1994
    %v2107 = vpack.c.b16 %v1999, %v1997
    %v2108 = vpack.c.b16 %v2000, %v1998
    %v2109 = vpack.c.b16 %v2003, %v2001
    %v2110 = vpack.c.b16 %v2004, %v2002
    %v2111 = vpack.c.b16 %v2007, %v2005
    %v2112 = vpack.c.b16 %v2008, %v2006
    %v2113 = vpack.c.b16 %v2011, %v2009
    %v2114 = vpack.c.b16 %v2012, %v2010
    %v2115 = vpack.c.b16 %v2015, %v2013
    %v2116 = vpack.c.b16 %v2016, %v2014
    %v2117 = vpack.c.b16 %v2019, %v2017
    %v2118 = vpack.c.b16 %v2020, %v2018
    %v2119 = vpack.c.b16 %v2023, %v2021
    %v2120 = vpack.c.b16 %v2024, %v2022
    %v2121 = vpack.c.b16 %v2027, %v2025
    %v2122 = vpack.c.b16 %v2028, %v2026
    %v2123 = vpack.c.b16 %v2031, %v2029
    %v2124 = vpack.c.b16 %v2032, %v2030
    %v2125 = vpack.c.b16 %v2035, %v2033
    %v2126 = vpack.c.b16 %v2036, %v2034
    %v2127 = vpack.c.b16 %v2039, %v2037
    %v2128 = vpack.c.b16 %v2040, %v2038
    %v2129 = vpack.c.b16 %v2043, %v2041
    %v2130 = vpack.c.b16 %v2044, %v2042
    %v2131 = vpack.c.b16 %v2047, %v2045
    %v2132 = vpack.c.b16 %v2048, %v2046
    %v2133 = vpack.c.b16 %v2051, %v2049
    %v2134 = vpack.c.b16 %v2052, %v2050
    %v2135 = vpack.c.b16 %v2055, %v2053
    %v2136 = vpack.c.b16 %v2056, %v2054
    %v2137 = vpack.c.b16 %v2059, %v2057
    %v2138 = vpack.c.b16 %v2060, %v2058
    %v2139 = vpack.c.b16 %v2063, %v2061
    %v2140 = vpack.c.b16 %v2064, %v2062
    %v2141 = vpack.c.b16 %v2067, %v2065
    %v2142 = vpack.c.b16 %v2068, %v2066
    %v2143 = vpack.c.b16 %v2071, %v2069
    %v2144 = vpack.c.b16 %v2072, %v2070
    %v2145 = vpack.c.b16 %v2075, %v2073
    %v2146 = vpack.c.b16 %v2076, %v2074
    %v2147 = vpack.c.b16 %v2079, %v2077
    %v2148 = vpack.c.b16 %v2080, %v2078
    %v2149 = vpack.c.b16 %v2083, %v2081
    %v2150 = vpack.c.b16 %v2084, %v2082
    %v2151 = vpack.c.b16 %v2087, %v2085
    %v2152 = vpack.c.b16 %v2088, %v2086
    %2217 = vmatprep.subr.bf16.mxu0 %v2104
    %2218 = vmatpush1.bf16.msra.mxu0 %v2103
    %2219 = vmatprep.subr.bf16.mxu0 %v2102
    %2220 = vmatpush1.bf16.msra.mxu0 %v2101
    %2221 = vmatprep.subr.bf16.mxu0 %v2100
    %2222 = vmatpush1.bf16.msra.mxu0 %v2099
    %2223 = vmatprep.subr.bf16.mxu0 %v2098
    %2224 = vmatpush1.bf16.msra.mxu0 %v2097
    %2225 = vmatprep.subr.bf16.mxu0 %v2096
    %2226 = vmatpush1.bf16.msra.mxu0 %v2095
    %2227 = vmatprep.subr.bf16.mxu0 %v2094
    %2228 = vmatpush1.bf16.msra.mxu0 %v2093
    %2229 = vmatprep.subr.bf16.mxu0 %v2092
    %2230 = vmatpush1.bf16.msra.mxu0 %v2091
    %2231 = vmatprep.subr.bf16.mxu0 %v2090
    %2232 = vmatpush1.bf16.msra.mxu0 %v2089
    %2233 = vmatprep.subr.bf16.mxu0 %v2120
    %2234 = vmatpush2.bf16.msra.mxu0 %v2119
    %2235 = vmatprep.subr.bf16.mxu0 %v2118
    %2236 = vmatpush2.bf16.msra.mxu0 %v2117
    %2237 = vmatprep.subr.bf16.mxu0 %v2116
    %2238 = vmatpush2.bf16.msra.mxu0 %v2115
    %2239 = vmatprep.subr.bf16.mxu0 %v2114
    %2240 = vmatpush2.bf16.msra.mxu0 %v2113
    %2241 = vmatprep.subr.bf16.mxu0 %v2112
    %2242 = vmatpush2.bf16.msra.mxu0 %v2111
    %2243 = vmatprep.subr.bf16.mxu0 %v2110
    %2244 = vmatpush2.bf16.msra.mxu0 %v2109
    %2245 = vmatprep.subr.bf16.mxu0 %v2108
    %2246 = vmatpush2.bf16.msra.mxu0 %v2107
    %2247 = vmatprep.subr.bf16.mxu0 %v2106
    %2248 = vmatpush2.bf16.msra.mxu0 %v2105
    %2249 = vmatprep.mubr.bf16.mxu0 %v1818
    %2250 = vmatmul.mubr.bf16.gmra.mxu0 %v1817
    %v2251 = vpop.f32.mrf.mxu0
    %v2252 = vadd.f32 %v1890, %v2251
    %v2253 = vpop.f32.mrf.mxu0
    %v2254 = vadd.f32 %v1894, %v2253
    %v2255 = vpop.f32.mrf.mxu0
    %v2256 = vadd.f32 %v1890, %v2255
    %v2257 = vpop.f32.mrf.mxu0
    %v2258 = vadd.f32 %v1894, %v2257
    %2259 = vdwg.mxu0
    %2260 = vmatprep.subr.bf16.mxu0 %v2136
    %2261 = vmatpush1.bf16.msra.mxu0 %v2135
    %2262 = vmatprep.subr.bf16.mxu0 %v2134
    %2263 = vmatpush1.bf16.msra.mxu0 %v2133
    %2264 = vmatprep.subr.bf16.mxu0 %v2132
    %2265 = vmatpush1.bf16.msra.mxu0 %v2131
    %2266 = vmatprep.subr.bf16.mxu0 %v2130
    %2267 = vmatpush1.bf16.msra.mxu0 %v2129
    %2268 = vmatprep.subr.bf16.mxu0 %v2128
    %2269 = vmatpush1.bf16.msra.mxu0 %v2127
    %2270 = vmatprep.subr.bf16.mxu0 %v2126
    %2271 = vmatpush1.bf16.msra.mxu0 %v2125
    %2272 = vmatprep.subr.bf16.mxu0 %v2124
    %2273 = vmatpush1.bf16.msra.mxu0 %v2123
    %2274 = vmatprep.subr.bf16.mxu0 %v2122
    %2275 = vmatpush1.bf16.msra.mxu0 %v2121
    %2276 = vmatprep.subr.bf16.mxu0 %v2152
    %2277 = vmatpush2.bf16.msra.mxu0 %v2151
    %2278 = vmatprep.subr.bf16.mxu0 %v2150
    %2279 = vmatpush2.bf16.msra.mxu0 %v2149
    %2280 = vmatprep.subr.bf16.mxu0 %v2148
    %2281 = vmatpush2.bf16.msra.mxu0 %v2147
    %2282 = vmatprep.subr.bf16.mxu0 %v2146
    %2283 = vmatpush2.bf16.msra.mxu0 %v2145
    %2284 = vmatprep.subr.bf16.mxu0 %v2144
    %2285 = vmatpush2.bf16.msra.mxu0 %v2143
    %2286 = vmatprep.subr.bf16.mxu0 %v2142
    %2287 = vmatpush2.bf16.msra.mxu0 %v2141
    %2288 = vmatprep.subr.bf16.mxu0 %v2140
    %2289 = vmatpush2.bf16.msra.mxu0 %v2139
    %2290 = vmatprep.subr.bf16.mxu0 %v2138
    %2291 = vmatpush2.bf16.msra.mxu0 %v2137
    %2292 = vmatprep.mubr.bf16.mxu0 %v1820
    %2293 = vmatmul.mubr.bf16.gmra.mxu0 %v1819
    %v2294 = vpop.f32.mrf.mxu0
    %v2295 = vadd.f32 %v2252, %v2294
    %v2296 = vpop.f32.mrf.mxu0
    %v2297 = vadd.f32 %v2254, %v2296
    %v2298 = vpop.f32.mrf.mxu0
    %v2299 = vadd.f32 %v2256, %v2298
    %v2300 = vpop.f32.mrf.mxu0
    %v2301 = vadd.f32 %v2258, %v2300
    %2302 = vdwg.mxu0
    %v2303 = vmax.f32 %v2295, 0.0
    %v2304 = vmax.f32 %v2297, 0.0
    %v2305 = vmax.f32 %v2299, 0.0
    %v2306 = vmax.f32 %v2301, 0.0
    %v2307 = vpack.c.bf16 %v2305, %v2303
    %v2308 = vpack.c.bf16 %v2306, %v2304
    %v2309 = vld [vmem:[%s5] sm:$0xf]
    %v2310 = vld [vmem:[%s5 + $0x4] sm:$0xf]
    %v2311 = vld [vmem:[%s5 + $0x8] sm:$0xf]
    %v2312 = vld [vmem:[%s5 + $0xc] sm:$0xf]
    %v2313 = vld [vmem:[%s5 + $0x10] sm:$0xf]
    %v2314 = vld [vmem:[%s5 + $0x14] sm:$0xf]
    %v2315 = vld [vmem:[%s5 + $0x18] sm:$0xf]
    %v2316 = vld [vmem:[%s5 + $0x1c] sm:$0xf]
    %v2317 = vld [vmem:[%s5 + $0x20] sm:$0xf]
    %v2318 = vld [vmem:[%s5 + $0x24] sm:$0xf]
    %v2319 = vld [vmem:[%s5 + $0x28] sm:$0xf]
    %v2320 = vld [vmem:[%s5 + $0x2c] sm:$0xf]
    %v2321 = vld [vmem:[%s5 + $0x30] sm:$0xf]
    %v2322 = vld [vmem:[%s5 + $0x34] sm:$0xf]
    %v2323 = vld [vmem:[%s5 + $0x38] sm:$0xf]
    %v2324 = vld [vmem:[%s5 + $0x3c] sm:$0xf]
    %v2325 = vld [vmem:[%s5 + $0x40] sm:$0xf]
    %v2326 = vld [vmem:[%s5 + $0x44] sm:$0xf]
    %v2327 = vld [vmem:[%s5 + $0x48] sm:$0xf]
    %v2328 = vld [vmem:[%s5 + $0x4c] sm:$0xf]
    %v2329 = vld [vmem:[%s5 + $0x50] sm:$0xf]
    %v2330 = vld [vmem:[%s5 + $0x54] sm:$0xf]
    %v2331 = vld [vmem:[%s5 + $0x58] sm:$0xf]
    %v2332 = vld [vmem:[%s5 + $0x5c] sm:$0xf]
    %v2333 = vld [vmem:[%s5 + $0x60] sm:$0xf]
    %v2334 = vld [vmem:[%s5 + $0x64] sm:$0xf]
    %v2335 = vld [vmem:[%s5 + $0x68] sm:$0xf]
    %v2336 = vld [vmem:[%s5 + $0x6c] sm:$0xf]
    %v2337 = vld [vmem:[%s5 + $0x70] sm:$0xf]
    %v2338 = vld [vmem:[%s5 + $0x74] sm:$0xf]
    %v2339 = vld [vmem:[%s5 + $0x78] sm:$0xf]
    %v2340 = vld [vmem:[%s5 + $0x7c] sm:$0xf]
    %v2341 = vld [vmem:[%s6] sm:$0x1]
    %v2343 = vlaneseq
    %v2344 = vshrl.u32 %v2343, 7
    %v2345 = vsub.s32 0, %v2344
    %v2346 = vrot.slane %v2341, %v2345
    %v2380 = vunpack.c.l.b16 %v2309
    %v2381 = vunpack.c.l.b16 %v2310
    %v2382 = vunpack.c.l.b16 %v2311
    %v2383 = vunpack.c.l.b16 %v2312
    %v2384 = vunpack.c.l.b16 %v2313
    %v2385 = vunpack.c.l.b16 %v2314
    %v2386 = vunpack.c.l.b16 %v2315
    %v2387 = vunpack.c.l.b16 %v2316
    %v2388 = vunpack.c.l.b16 %v2317
    %v2389 = vunpack.c.l.b16 %v2318
    %v2390 = vunpack.c.l.b16 %v2319
    %v2391 = vunpack.c.l.b16 %v2320
    %v2392 = vunpack.c.l.b16 %v2321
    %v2393 = vunpack.c.l.b16 %v2322
    %v2394 = vunpack.c.l.b16 %v2323
    %v2395 = vunpack.c.l.b16 %v2324
    %v2396 = vunpack.c.l.b16 %v2325
    %v2397 = vunpack.c.l.b16 %v2326
    %v2398 = vunpack.c.l.b16 %v2327
    %v2399 = vunpack.c.l.b16 %v2328
    %v2400 = vunpack.c.l.b16 %v2329
    %v2401 = vunpack.c.l.b16 %v2330
    %v2402 = vunpack.c.l.b16 %v2331
    %v2403 = vunpack.c.l.b16 %v2332
    %v2404 = vunpack.c.l.b16 %v2333
    %v2405 = vunpack.c.l.b16 %v2334
    %v2406 = vunpack.c.l.b16 %v2335
    %v2407 = vunpack.c.l.b16 %v2336
    %v2408 = vunpack.c.l.b16 %v2337
    %v2409 = vunpack.c.l.b16 %v2338
    %v2410 = vunpack.c.l.b16 %v2339
    %v2411 = vunpack.c.l.b16 %v2340
    %v2412 = vpack.c.b16 %v2381, %v2380
    %v2413 = vpack.c.b16 %v2383, %v2382
    %v2414 = vpack.c.b16 %v2385, %v2384
    %v2415 = vpack.c.b16 %v2387, %v2386
    %v2416 = vpack.c.b16 %v2389, %v2388
    %v2417 = vpack.c.b16 %v2391, %v2390
    %v2418 = vpack.c.b16 %v2393, %v2392
    %v2419 = vpack.c.b16 %v2395, %v2394
    %v2420 = vpack.c.b16 %v2397, %v2396
    %v2421 = vpack.c.b16 %v2399, %v2398
    %v2422 = vpack.c.b16 %v2401, %v2400
    %v2423 = vpack.c.b16 %v2403, %v2402
    %v2424 = vpack.c.b16 %v2405, %v2404
    %v2425 = vpack.c.b16 %v2407, %v2406
    %v2426 = vpack.c.b16 %v2409, %v2408
    %v2427 = vpack.c.b16 %v2411, %v2410
    %2444 = vmatprep.subr.bf16.mxu0 0
    %2445 = vmatpush1.bf16.msra.mxu0 %v2419
    %2446 = vmatprep.subr.bf16.mxu0 0
    %2447 = vmatpush1.bf16.msra.mxu0 %v2418
    %2448 = vmatprep.subr.bf16.mxu0 0
    %2449 = vmatpush1.bf16.msra.mxu0 %v2417
    %2450 = vmatprep.subr.bf16.mxu0 0
    %2451 = vmatpush1.bf16.msra.mxu0 %v2416
    %2452 = vmatprep.subr.bf16.mxu0 0
    %2453 = vmatpush1.bf16.msra.mxu0 %v2415
    %2454 = vmatprep.subr.bf16.mxu0 0
    %2455 = vmatpush1.bf16.msra.mxu0 %v2414
    %2456 = vmatprep.subr.bf16.mxu0 0
    %2457 = vmatpush1.bf16.msra.mxu0 %v2413
    %2458 = vmatprep.subr.bf16.mxu0 0
    %2459 = vmatpush1.bf16.msra.mxu0 %v2412
    %2460 = vmatprep.subr.bf16.mxu0 0
    %2461 = vmatpush2.bf16.msra.mxu0 %v2427
    %2462 = vmatprep.subr.bf16.mxu0 0
    %2463 = vmatpush2.bf16.msra.mxu0 %v2426
    %2464 = vmatprep.subr.bf16.mxu0 0
    %2465 = vmatpush2.bf16.msra.mxu0 %v2425
    %2466 = vmatprep.subr.bf16.mxu0 0
    %2467 = vmatpush2.bf16.msra.mxu0 %v2424
    %2468 = vmatprep.subr.bf16.mxu0 0
    %2469 = vmatpush2.bf16.msra.mxu0 %v2423
    %2470 = vmatprep.subr.bf16.mxu0 0
    %2471 = vmatpush2.bf16.msra.mxu0 %v2422
    %2472 = vmatprep.subr.bf16.mxu0 0
    %2473 = vmatpush2.bf16.msra.mxu0 %v2421
    %2474 = vmatprep.subr.bf16.mxu0 0
    %2475 = vmatpush2.bf16.msra.mxu0 %v2420
    %2476 = vmatprep.mubr.bf16.mxu0 %v2308
    %2477 = vmatmul.mubr.bf16.gmra.mxu0 %v2307
    %v2478 = vpop.f32.mrf.mxu0
    %v2479 = vadd.f32 %v2346, %v2478
    %v2480 = vpop.f32.mrf.mxu0
    %v2481 = vpop.f32.mrf.mxu0
    %v2482 = vadd.f32 %v2346, %v2481
    %v2483 = vpop.f32.mrf.mxu0
    %2484 = vdwg.mxu0
    %v2485 = vmax.f32 %v2479, 0.0
    %v2486 = vmax.f32 %v2482, 0.0
    %2487 = vst [vmem:[%s7] sm:$0xff] %v2485
    %2488 = vst [vmem:[%s7 + $0x8] sm:$0xff] %v2486
    // Predicated region
    $region38: #{simple_fc_forward.1} parent=1 // pred_check
      _
    $region39: #{simple_fc_forward.1} parent=1 // pred_check_branch
      %2490 = sbr.rel (0) target = $region41
    $region40: #{simple_fc_forward.1} parent=1 // pred_region
      _
    $region41: #{simple_fc_forward.1} parent=1 // pred_fallthru
      _
    // Predicated region
    $region42: #{simple_fc_forward.1} parent=1 // pred_check
      _
    $region43: #{simple_fc_forward.1} parent=1 // pred_check_branch
      %2492 = sbr.rel (0) target = $region45
    $region44: #{simple_fc_forward.1} parent=1 // pred_region
      _
    $region45: #{simple_fc_forward.1} parent=1 // pred_fallthru
      _
    %2493 = vsyncpa [#allocation3], 1
    %2494 = vsyncpa [#allocation5], 1

</llo_original>
